<compile_context>
chip_gen: v5e
topology: v5e:2x2
jax: 0.10.0
libtpu: 0.0.40
codegen_flags: <defaults>
</compile_context>

<pallas_src>
import functools

import numpy as np
import jax
import jax.numpy as jnp
from jax import lax
from jax.experimental import pallas as pl
from jax.experimental.pallas import tpu as pltpu


# MXU operand dtype (accumulation stays f32 via preferred_element_type).
MATMUL_DTYPE = jnp.bfloat16


# ------------------------------ Pallas kernel ------------------------------- #
def _lenet_fused_kernel(xp_ref, b1_ref, bias1_ref, p1r_ref, p1c_ref,
                        b2_ref, bias2_ref, p2r_ref, p2c_ref,
                        m3_ref, b3_ref, w4_ref, b4_ref, w5_ref, b5_ref,
                        out_ref, pooled_ref):
    """LeNet forward for one batch-block of `bb` samples (one grid step).

    Conv stage (conv1 -> pool1 -> conv2 -> pool2) runs per-sample inside a
    fori_loop in a channels-last (H, W*C) layout: each 5x5 conv is 5 banded MXU
    matmuls, avg-pool is a pair of tiny matmuls.  Pooled activations are staged
    into a VMEM scratch, then the whole FC stage (fc3/fc4/fc5) runs batched with
    M = bb so the MXU sublane dimension is filled.  Matmul operands are bf16,
    accumulation and elementwise math are f32.
    """
    f32 = jnp.float32
    bb = xp_ref.shape[0]

    def conv_relu(a, band_ref, bias_ref):
        # a: (Hin, Win*Ci) f32; band_ref: (kh, Win*Ci, Wout*Co); bias: (1, Wout*Co)
        kh = band_ref.shape[0]
        ho = a.shape[0] - (kh - 1)
        # Bias folded into the first band's matmul (no zero-init materialization).
        acc = jnp.dot(a[0:ho, :].astype(band_ref.dtype), band_ref[0],
                      preferred_element_type=f32) + bias_ref[...]
        for i in range(1, kh):
            acc = acc + jnp.dot(a[i:i + ho, :].astype(band_ref.dtype), band_ref[i],
                                preferred_element_type=f32)
        return jnp.maximum(acc, 0.0)

    def avg_pool(a, r_ref, c_ref):
        # pooled = R @ a @ C (2x2 mean, stride 2) in the (H, W*C) layout; f32.
        t = jnp.dot(r_ref[...], a, preferred_element_type=f32)
        return jnp.dot(t, c_ref[...], preferred_element_type=f32)

    # ---- per-sample conv stage -> pooled activations (bb, 5, 80) in VMEM ---- #
    def sample_body(b, carry):
        a = xp_ref[b]                             # (32, 32*Ci) f32
        a = conv_relu(a, b1_ref, bias1_ref)       # (28, 28*6)
        a = avg_pool(a, p1r_ref, p1c_ref)         # (14, 14*6)
        a = conv_relu(a, b2_ref, bias2_ref)       # (10, 10*16)
        a = avg_pool(a, p2r_ref, p2c_ref)         # (5,  5*16)
        pooled_ref[b] = a
        return carry

    lax.fori_loop(0, bb, sample_body, 0)

    # ---- batched FC stage: M = bb fills the MXU sublane dimension ---- #
    pooled = pooled_ref[...]                      # (bb, 5, 80) f32
    acc = jnp.dot(pooled[:, 0, :].astype(m3_ref.dtype), m3_ref[0],
                  preferred_element_type=f32) + b3_ref[...]
    for y in range(1, m3_ref.shape[0]):
        acc = acc + jnp.dot(pooled[:, y, :].astype(m3_ref.dtype), m3_ref[y],
                            preferred_element_type=f32)
    h = jnp.maximum(acc, 0.0)                                              # (bb, 120)
    h = jnp.maximum(jnp.dot(h.astype(w4_ref.dtype), w4_ref[...],
                            preferred_element_type=f32) + b4_ref[...], 0.0)  # (bb, 84)
    # Lane-dense (bb, 128) logits block; wrapper slices [:n, :out_dim].
    out_ref[...] = jnp.dot(h.astype(w5_ref.dtype), w5_ref[...],
                           preferred_element_type=f32) + b5_ref[...]


# --------------------------- host-side preprocessing ------------------------ #
def init_lenet_params(key, input_channel=1, output_channel=2):
    ks = jax.random.split(key, 10)
    s = 0.1

    def rn(k, shape):
        return s * jax.random.normal(k, shape, dtype=jnp.float32)

    return {
        "w1": rn(ks[0], (6, input_channel, 5, 5)), "b1": rn(ks[1], (6,)),
        "w2": rn(ks[2], (16, 6, 5, 5)),            "b2": rn(ks[3], (16,)),
        "w3": rn(ks[4], (16 * 5 * 5, 120)),        "b3": rn(ks[5], (120,)),
        "w4": rn(ks[6], (120, 84)),                "b4": rn(ks[7], (84,)),
        "w5": rn(ks[8], (84, output_channel)),     "b5": rn(ks[9], (output_channel,)),
    }


def prepare_lenet_operands(params, *, height=28, width=28, matmul_dtype=MATMUL_DTYPE):
    """One-time host-side preprocessing of LeNet weights into the matrices the
    fused kernel consumes: banded conv matrices, pooling matrices, tiled biases,
    permuted fc3 weight and lane-padded final layer.  Matmul operands are cast
    to `matmul_dtype` (bf16) once here; biases/pool matrices stay f32."""
    cw1 = np.asarray(params["w1"], np.float32)   # (6,  Ci, 5, 5)
    cb1 = np.asarray(params["b1"], np.float32)
    cw2 = np.asarray(params["w2"], np.float32)   # (16, 6, 5, 5)
    cb2 = np.asarray(params["b2"], np.float32)
    w3 = np.asarray(params["w3"], np.float32)    # (16*5*5, 120), in-index = c*25+y*5+x
    b3 = np.asarray(params["b3"], np.float32)
    w4 = np.asarray(params["w4"], np.float32)    # (120, 84)
    b4 = np.asarray(params["b4"], np.float32)
    w5 = np.asarray(params["w5"], np.float32)    # (84, out)
    b5 = np.asarray(params["b5"], np.float32)

    def banded(w, wout):
        # (Co,Ci,kh,kw) -> (kh, (wout+kw-1)*Ci, wout*Co) so that, in the channels-last
        # (H, W*C) layout: conv(x,w)[y, xo*Co+co] = sum_i (x[i:i+ho, :] @ B[i])[y, xo*Co+co]
        co, ci, kh, kw = w.shape
        win = wout + kw - 1
        B = np.zeros((kh, win * ci, wout * co), np.float32)
        for i in range(kh):
            for xo in range(wout):
                for j in range(kw):
                    B[i, (xo + j) * ci:(xo + j + 1) * ci,
                      xo * co:(xo + 1) * co] = w[:, :, i, j].T
        return B

    def pool_mats(hin, win, c):
        # pooled = R @ act @ C  (2x2 mean, stride 2) in the (H, W*C) layout.
        ho, wo = hin // 2, win // 2
        R = np.zeros((ho, hin), np.float32)
        R[np.arange(ho), 2 * np.arange(ho)] = 0.5
        R[np.arange(ho), 2 * np.arange(ho) + 1] = 0.5
        C = np.zeros((win * c, wo * c), np.float32)
        eye = 0.5 * np.eye(c, dtype=np.float32)
        for x in range(wo):
            for dx in range(2):
                C[(2 * x + dx) * c:(2 * x + dx + 1) * c, x * c:(x + 1) * c] = eye
        return R, C

    c1, c2 = cw1.shape[0], cw2.shape[0]          # 6, 16
    h1, w1o = height, width                      # conv1 output spatial (28, 28)
    B1 = banded(cw1, w1o)                        # (5, 32*Ci, 168)
    bias1 = np.tile(cb1, w1o)[None, :]           # (1, 168)
    P1R, P1C = pool_mats(h1, w1o, c1)            # (14, 28), (168, 84)

    h2i, w2i = h1 // 2, w1o // 2                 # 14, 14
    h2o, w2o = h2i - 4, w2i - 4                  # 10, 10
    B2 = banded(cw2, w2o)                        # (5, 84, 160)
    bias2 = np.tile(cb2, w2o)[None, :]           # (1, 160)
    P2R, P2C = pool_mats(h2o, w2o, c2)           # (5, 10), (160, 80)

    hp, wp = h2o // 2, w2o // 2                  # 5, 5
    assert c2 * hp * wp == w3.shape[0], "Linear(16*5*5, 120) requires 28x28 input"
    # fc3 weight permuted to the kernel's pooled layout (row=y, col=x*C+c).
    M3 = np.zeros((hp, wp * c2, w3.shape[1]), np.float32)
    for y in range(hp):
        for x in range(wp):
            for c in range(c2):
                M3[y, x * c2 + c, :] = w3[c * (hp * wp) + y * wp + x, :]

    # Final layer padded to 128 lanes -> unmasked, lane-dense output store.
    W5 = np.zeros((w4.shape[1], 128), np.float32)
    W5[:, :w5.shape[1]] = w5
    B5 = np.zeros((1, 128), np.float32)
    B5[0, :w5.shape[1]] = b5

    jmx = lambda a: jnp.asarray(a, matmul_dtype)     # MXU operands
    jf = lambda a: jnp.asarray(a, jnp.float32)       # biases / pool matrices
    return {
        "B1": jmx(B1), "bias1": jf(bias1), "P1R": jf(P1R), "P1C": jf(P1C),
        "B2": jmx(B2), "bias2": jf(bias2), "P2R": jf(P2R), "P2C": jf(P2C),
        "M3": jmx(M3), "b3": jf(b3[None, :]),
        "W4": jmx(w4), "b4": jf(b4[None, :]),
        "W5": jmx(W5), "b5": jf(B5),
    }


# ------------------------------ forward wrapper ------------------------------ #
def _const_spec(arr):
    nd = arr.ndim
    return pl.BlockSpec(arr.shape, lambda i, _nd=nd: (0,) * _nd)


def _round_up(x, m):
    return -(-x // m) * m


def lenet_forward(ops, x, *, out_dim=2, block_b=128):
    """x: (N, Cin, 28, 28) float32 -> (N, out_dim)."""
    n, ci, h, w = x.shape
    # conv1 padding=2, then channels-last (H, W*C) per-sample rows.
    xp = jnp.pad(x.astype(jnp.float32), ((0, 0), (0, 0), (2, 2), (2, 2)))
    if ci == 1:
        xp = xp.reshape(n, h + 4, w + 4)       # pure reshape, no transpose copy
    else:
        xp = xp.transpose(0, 2, 3, 1).reshape(n, h + 4, (w + 4) * ci)

    # Batch-block: bb samples per grid step (multiple of 8).  With large N,
    # grid = N/bb stays >= 2 so "parallel" shards it across v7x's 2 TensorCores.
    bb = min(block_b, _round_up(n, 8))
    n_pad = _round_up(n, bb)
    if n_pad != n:
        xp = jnp.pad(xp, ((0, n_pad - n), (0, 0), (0, 0)))

    hp = ops["P2R"].shape[0]                   # 5
    fp = ops["P2C"].shape[1]                   # 5*16 = 80

    operands = (xp, ops["B1"], ops["bias1"], ops["P1R"], ops["P1C"],
                ops["B2"], ops["bias2"], ops["P2R"], ops["P2C"],
                ops["M3"], ops["b3"], ops["W4"], ops["b4"], ops["W5"], ops["b5"])
    in_specs = [pl.BlockSpec((bb, h + 4, (w + 4) * ci), lambda i: (i, 0, 0))]
    in_specs += [_const_spec(a) for a in operands[1:]]

    out = pl.pallas_call(
        _lenet_fused_kernel,
        out_shape=jax.ShapeDtypeStruct((n_pad, 128), jnp.float32),
        grid=(n_pad // bb,),
        in_specs=in_specs,
        out_specs=pl.BlockSpec((bb, 128), lambda i: (i, 0)),
        scratch_shapes=[pltpu.VMEM((bb, hp, fp), jnp.float32)],
        compiler_params=pltpu.CompilerParams(dimension_semantics=("parallel",)),
    )(*operands)
    return out[:n, :out_dim]


def my_model_forward(ops, x, col, target, change_col=False, *, out_dim=2):
    # backdoor_adjustment=False (default): return (self.net(x), target)
    # TODO(synk): backdoor_adjustment=True branch uses boolean-mask batch selection
    # (data-dependent output shapes) -> not expressible as a static Pallas grid.
    del col, change_col
    return lenet_forward(ops, x, out_dim=out_dim), target


# --------------------------------- reference --------------------------------- #
def lenet_ref(params, x):
    def conv(x, w, b, pad):
        y = jax.lax.conv_general_dilated(
            x, w, (1, 1), [(pad, pad), (pad, pad)],
            dimension_numbers=("NCHW", "OIHW", "NCHW"))
        return y + b.reshape(1, -1, 1, 1)

    def pool(x):
        n, c, h, w = x.shape
        return x.reshape(n, c, h // 2, 2, w // 2, 2).mean(axis=(3, 5))

    y = pool(jax.nn.relu(conv(x, params["w1"], params["b1"], 2)))
    y = pool(jax.nn.relu(conv(y, params["w2"], params["b2"], 0)))
    y = y.reshape(x.shape[0], -1)
    y = jax.nn.relu(y @ params["w3"] + params["b3"])
    y = jax.nn.relu(y @ params["w4"] + params["b4"])
    return y @ params["w5"] + params["b5"]


if __name__ == "__main__":
    key = jax.random.PRNGKey(0)
    kx, kt, kp = jax.random.split(key, 3)

    # Shapes implied by the module: Linear(16*5*5, 120) forces 28x28 input.
    x = jax.random.normal(kx, (2, 1, 28, 28), dtype=jnp.float32)
    col = jnp.array([0, 1], dtype=jnp.int32)
    target = jax.random.randint(kt, (2,), 0, 2, dtype=jnp.int32)

    params = init_lenet_params(kp, input_channel=1, output_channel=2)
    ops = prepare_lenet_operands(params)        # host-side, once

    fwd = jax.jit(functools.partial(my_model_forward, out_dim=2))
    pred, tgt_out = fwd(ops, x, col, target, False)
    pred = jax.block_until_ready(pred)
    tgt_out = jax.block_until_ready(tgt_out)

    ref = lenet_ref(params, x)
    assert pred.shape == (2, 2) and tgt_out.shape == (2,)
    # bf16 MXU operands (f32 accumulation) vs f32 reference -> loosened tolerance.
    assert jnp.allclose(pred, ref, atol=2e-2, rtol=2e-2), "mismatch vs JAX reference"
    assert jnp.array_equal(tgt_out, target)

    print("KERNEL_OK")
</pallas_src>

<mosaic_0001>
module attributes {stable_mosaic.version = 11 : i64} {
  func.func @_lenet_fused_kernel(%arg0: i32, %arg1: memref<8x32x32xf32, #tpu.memory_space<vmem>>, %arg2: memref<5x32x168xbf16, #tpu.memory_space<vmem>>, %arg3: memref<1x168xf32, #tpu.memory_space<vmem>>, %arg4: memref<14x28xf32, #tpu.memory_space<vmem>>, %arg5: memref<168x84xf32, #tpu.memory_space<vmem>>, %arg6: memref<5x84x160xbf16, #tpu.memory_space<vmem>>, %arg7: memref<1x160xf32, #tpu.memory_space<vmem>>, %arg8: memref<5x10xf32, #tpu.memory_space<vmem>>, %arg9: memref<160x80xf32, #tpu.memory_space<vmem>>, %arg10: memref<5x80x120xbf16, #tpu.memory_space<vmem>>, %arg11: memref<1x120xf32, #tpu.memory_space<vmem>>, %arg12: memref<120x84xbf16, #tpu.memory_space<vmem>>, %arg13: memref<1x84xf32, #tpu.memory_space<vmem>>, %arg14: memref<84x128xbf16, #tpu.memory_space<vmem>>, %arg15: memref<1x128xf32, #tpu.memory_space<vmem>>, %arg16: memref<8x128xf32, #tpu.memory_space<vmem>>, %arg17: memref<8x5x80xf32, #tpu.memory_space<vmem>>) attributes {dimension_semantics = [#tpu.dimension_semantics<parallel>], iteration_bounds = array<i64: 1>, scalar_prefetch = 0 : i64, scratch_operands = 1 : i64, tpu.core_type = #tpu.core_type<tc>, window_params = [{transform_indices = @transform_0, window_bounds = array<i64: 8, 32, 32>}, {pipeline_mode = #tpu.pipeline_mode<synchronous>, transform_indices = @transform_1, window_bounds = array<i64: 5, 32, 168>}, {pipeline_mode = #tpu.pipeline_mode<synchronous>, transform_indices = @transform_2, window_bounds = array<i64: 1, 168>}, {pipeline_mode = #tpu.pipeline_mode<synchronous>, transform_indices = @transform_3, window_bounds = array<i64: 14, 28>}, {pipeline_mode = #tpu.pipeline_mode<synchronous>, transform_indices = @transform_4, window_bounds = array<i64: 168, 84>}, {pipeline_mode = #tpu.pipeline_mode<synchronous>, transform_indices = @transform_5, window_bounds = array<i64: 5, 84, 160>}, {pipeline_mode = #tpu.pipeline_mode<synchronous>, transform_indices = @transform_6, window_bounds = array<i64: 1, 160>}, {pipeline_mode = #tpu.pipeline_mode<synchronous>, transform_indices = @transform_7, window_bounds = array<i64: 5, 10>}, {pipeline_mode = #tpu.pipeline_mode<synchronous>, transform_indices = @transform_8, window_bounds = array<i64: 160, 80>}, {pipeline_mode = #tpu.pipeline_mode<synchronous>, transform_indices = @transform_9, window_bounds = array<i64: 5, 80, 120>}, {pipeline_mode = #tpu.pipeline_mode<synchronous>, transform_indices = @transform_10, window_bounds = array<i64: 1, 120>}, {pipeline_mode = #tpu.pipeline_mode<synchronous>, transform_indices = @transform_11, window_bounds = array<i64: 120, 84>}, {pipeline_mode = #tpu.pipeline_mode<synchronous>, transform_indices = @transform_12, window_bounds = array<i64: 1, 84>}, {pipeline_mode = #tpu.pipeline_mode<synchronous>, transform_indices = @transform_13, window_bounds = array<i64: 84, 128>}, {pipeline_mode = #tpu.pipeline_mode<synchronous>, transform_indices = @transform_14, window_bounds = array<i64: 1, 128>}, {transform_indices = @transform_15, window_bounds = array<i64: 8, 128>}]} {
    %c0_i32 = arith.constant 0 : i32
    %c8_i32 = arith.constant 8 : i32
    %0 = arith.addi %c0_i32, %c8_i32 : i32
    %c1_i32 = arith.constant 1 : i32
    scf.for %arg18 = %c0_i32 to %0 step %c1_i32  : i32 {
      %56 = arith.index_cast %arg18 : i32 to index
      %c0_34 = arith.constant 0 : index
      %c0_35 = arith.constant 0 : index
      %57 = vector.load %arg1[%56, %c0_34, %c0_35] : memref<8x32x32xf32, #tpu.memory_space<vmem>>, vector<1x32x32xf32>
      %58 = vector.shape_cast %57 : vector<1x32x32xf32> to vector<32x32xf32>
      %59 = vector.extract_strided_slice %58 {offsets = [0, 0], sizes = [28, 32], strides = [1, 1]} : vector<32x32xf32> to vector<28x32xf32>
      %60 = arith.truncf %59 : vector<28x32xf32> to vector<28x32xbf16>
      %c0_36 = arith.constant 0 : index
      %c0_37 = arith.constant 0 : index
      %c0_38 = arith.constant 0 : index
      %61 = vector.load %arg2[%c0_36, %c0_37, %c0_38] : memref<5x32x168xbf16, #tpu.memory_space<vmem>>, vector<1x32x168xbf16>
      %62 = vector.shape_cast %61 : vector<1x32x168xbf16> to vector<32x168xbf16>
      %cst_39 = arith.constant dense<0.000000e+00> : vector<28x168xf32>
      %63 = tpu.matmul %60, %62, %cst_39 {dimension_numbers = #tpu.dot_dimension_numbers<[1], [0], [0], [1], [0, 0, 1, 1], [], []>} : vector<28x32xbf16>, vector<32x168xbf16>, vector<28x168xf32> -> vector<28x168xf32>
      %c0_40 = arith.constant 0 : index
      %c0_41 = arith.constant 0 : index
      %64 = vector.load %arg3[%c0_40, %c0_41] : memref<1x168xf32, #tpu.memory_space<vmem>>, vector<1x168xf32>
      %65 = vector.broadcast %64 : vector<1x168xf32> to vector<28x168xf32>
      %66 = arith.addf %63, %65 : vector<28x168xf32>
      %67 = vector.extract_strided_slice %58 {offsets = [1, 0], sizes = [28, 32], strides = [1, 1]} : vector<32x32xf32> to vector<28x32xf32>
      %68 = arith.truncf %67 : vector<28x32xf32> to vector<28x32xbf16>
      %c1_42 = arith.constant 1 : index
      %c0_43 = arith.constant 0 : index
      %c0_44 = arith.constant 0 : index
      %69 = vector.load %arg2[%c1_42, %c0_43, %c0_44] : memref<5x32x168xbf16, #tpu.memory_space<vmem>>, vector<1x32x168xbf16>
      %70 = vector.shape_cast %69 : vector<1x32x168xbf16> to vector<32x168xbf16>
      %cst_45 = arith.constant dense<0.000000e+00> : vector<28x168xf32>
      %71 = tpu.matmul %68, %70, %cst_45 {dimension_numbers = #tpu.dot_dimension_numbers<[1], [0], [0], [1], [0, 0, 1, 1], [], []>} : vector<28x32xbf16>, vector<32x168xbf16>, vector<28x168xf32> -> vector<28x168xf32>
      %72 = arith.addf %66, %71 : vector<28x168xf32>
      %73 = vector.extract_strided_slice %58 {offsets = [2, 0], sizes = [28, 32], strides = [1, 1]} : vector<32x32xf32> to vector<28x32xf32>
      %74 = arith.truncf %73 : vector<28x32xf32> to vector<28x32xbf16>
      %c2_46 = arith.constant 2 : index
      %c0_47 = arith.constant 0 : index
      %c0_48 = arith.constant 0 : index
      %75 = vector.load %arg2[%c2_46, %c0_47, %c0_48] : memref<5x32x168xbf16, #tpu.memory_space<vmem>>, vector<1x32x168xbf16>
      %76 = vector.shape_cast %75 : vector<1x32x168xbf16> to vector<32x168xbf16>
      %cst_49 = arith.constant dense<0.000000e+00> : vector<28x168xf32>
      %77 = tpu.matmul %74, %76, %cst_49 {dimension_numbers = #tpu.dot_dimension_numbers<[1], [0], [0], [1], [0, 0, 1, 1], [], []>} : vector<28x32xbf16>, vector<32x168xbf16>, vector<28x168xf32> -> vector<28x168xf32>
      %78 = arith.addf %72, %77 : vector<28x168xf32>
      %79 = vector.extract_strided_slice %58 {offsets = [3, 0], sizes = [28, 32], strides = [1, 1]} : vector<32x32xf32> to vector<28x32xf32>
      %80 = arith.truncf %79 : vector<28x32xf32> to vector<28x32xbf16>
      %c3_50 = arith.constant 3 : index
      %c0_51 = arith.constant 0 : index
      %c0_52 = arith.constant 0 : index
      %81 = vector.load %arg2[%c3_50, %c0_51, %c0_52] : memref<5x32x168xbf16, #tpu.memory_space<vmem>>, vector<1x32x168xbf16>
      %82 = vector.shape_cast %81 : vector<1x32x168xbf16> to vector<32x168xbf16>
      %cst_53 = arith.constant dense<0.000000e+00> : vector<28x168xf32>
      %83 = tpu.matmul %80, %82, %cst_53 {dimension_numbers = #tpu.dot_dimension_numbers<[1], [0], [0], [1], [0, 0, 1, 1], [], []>} : vector<28x32xbf16>, vector<32x168xbf16>, vector<28x168xf32> -> vector<28x168xf32>
      %84 = arith.addf %78, %83 : vector<28x168xf32>
      %85 = vector.extract_strided_slice %58 {offsets = [4, 0], sizes = [28, 32], strides = [1, 1]} : vector<32x32xf32> to vector<28x32xf32>
      %86 = arith.truncf %85 : vector<28x32xf32> to vector<28x32xbf16>
      %c4_54 = arith.constant 4 : index
      %c0_55 = arith.constant 0 : index
      %c0_56 = arith.constant 0 : index
      %87 = vector.load %arg2[%c4_54, %c0_55, %c0_56] : memref<5x32x168xbf16, #tpu.memory_space<vmem>>, vector<1x32x168xbf16>
      %88 = vector.shape_cast %87 : vector<1x32x168xbf16> to vector<32x168xbf16>
      %cst_57 = arith.constant dense<0.000000e+00> : vector<28x168xf32>
      %89 = tpu.matmul %86, %88, %cst_57 {dimension_numbers = #tpu.dot_dimension_numbers<[1], [0], [0], [1], [0, 0, 1, 1], [], []>} : vector<28x32xbf16>, vector<32x168xbf16>, vector<28x168xf32> -> vector<28x168xf32>
      %90 = arith.addf %84, %89 : vector<28x168xf32>
      %cst_58 = arith.constant 0.000000e+00 : f32
      %91 = vector.broadcast %cst_58 : f32 to vector<28x168xf32>
      %92 = arith.maximumf %90, %91 : vector<28x168xf32>
      %c0_59 = arith.constant 0 : index
      %c0_60 = arith.constant 0 : index
      %93 = vector.load %arg4[%c0_59, %c0_60] : memref<14x28xf32, #tpu.memory_space<vmem>>, vector<14x28xf32>
      %cst_61 = arith.constant dense<0.000000e+00> : vector<14x168xf32>
      %94 = tpu.matmul %93, %92, %cst_61 {dimension_numbers = #tpu.dot_dimension_numbers<[1], [0], [0], [1], [0, 0, 1, 1], [], []>} : vector<14x28xf32>, vector<28x168xf32>, vector<14x168xf32> -> vector<14x168xf32>
      %c0_62 = arith.constant 0 : index
      %c0_63 = arith.constant 0 : index
      %95 = vector.load %arg5[%c0_62, %c0_63] : memref<168x84xf32, #tpu.memory_space<vmem>>, vector<168x84xf32>
      %cst_64 = arith.constant dense<0.000000e+00> : vector<14x84xf32>
      %96 = tpu.matmul %94, %95, %cst_64 {dimension_numbers = #tpu.dot_dimension_numbers<[1], [0], [0], [1], [0, 0, 1, 1], [], []>} : vector<14x168xf32>, vector<168x84xf32>, vector<14x84xf32> -> vector<14x84xf32>
      %97 = vector.extract_strided_slice %96 {offsets = [0, 0], sizes = [10, 84], strides = [1, 1]} : vector<14x84xf32> to vector<10x84xf32>
      %98 = arith.truncf %97 : vector<10x84xf32> to vector<10x84xbf16>
      %c0_65 = arith.constant 0 : index
      %c0_66 = arith.constant 0 : index
      %c0_67 = arith.constant 0 : index
      %99 = vector.load %arg6[%c0_65, %c0_66, %c0_67] : memref<5x84x160xbf16, #tpu.memory_space<vmem>>, vector<1x84x160xbf16>
      %100 = vector.shape_cast %99 : vector<1x84x160xbf16> to vector<84x160xbf16>
      %cst_68 = arith.constant dense<0.000000e+00> : vector<10x160xf32>
      %101 = tpu.matmul %98, %100, %cst_68 {dimension_numbers = #tpu.dot_dimension_numbers<[1], [0], [0], [1], [0, 0, 1, 1], [], []>} : vector<10x84xbf16>, vector<84x160xbf16>, vector<10x160xf32> -> vector<10x160xf32>
      %c0_69 = arith.constant 0 : index
      %c0_70 = arith.constant 0 : index
      %102 = vector.load %arg7[%c0_69, %c0_70] : memref<1x160xf32, #tpu.memory_space<vmem>>, vector<1x160xf32>
      %103 = vector.broadcast %102 : vector<1x160xf32> to vector<10x160xf32>
      %104 = arith.addf %101, %103 : vector<10x160xf32>
      %105 = vector.extract_strided_slice %96 {offsets = [1, 0], sizes = [10, 84], strides = [1, 1]} : vector<14x84xf32> to vector<10x84xf32>
      %106 = arith.truncf %105 : vector<10x84xf32> to vector<10x84xbf16>
      %c1_71 = arith.constant 1 : index
      %c0_72 = arith.constant 0 : index
      %c0_73 = arith.constant 0 : index
      %107 = vector.load %arg6[%c1_71, %c0_72, %c0_73] : memref<5x84x160xbf16, #tpu.memory_space<vmem>>, vector<1x84x160xbf16>
      %108 = vector.shape_cast %107 : vector<1x84x160xbf16> to vector<84x160xbf16>
      %cst_74 = arith.constant dense<0.000000e+00> : vector<10x160xf32>
      %109 = tpu.matmul %106, %108, %cst_74 {dimension_numbers = #tpu.dot_dimension_numbers<[1], [0], [0], [1], [0, 0, 1, 1], [], []>} : vector<10x84xbf16>, vector<84x160xbf16>, vector<10x160xf32> -> vector<10x160xf32>
      %110 = arith.addf %104, %109 : vector<10x160xf32>
      %111 = vector.extract_strided_slice %96 {offsets = [2, 0], sizes = [10, 84], strides = [1, 1]} : vector<14x84xf32> to vector<10x84xf32>
      %112 = arith.truncf %111 : vector<10x84xf32> to vector<10x84xbf16>
      %c2_75 = arith.constant 2 : index
      %c0_76 = arith.constant 0 : index
      %c0_77 = arith.constant 0 : index
      %113 = vector.load %arg6[%c2_75, %c0_76, %c0_77] : memref<5x84x160xbf16, #tpu.memory_space<vmem>>, vector<1x84x160xbf16>
      %114 = vector.shape_cast %113 : vector<1x84x160xbf16> to vector<84x160xbf16>
      %cst_78 = arith.constant dense<0.000000e+00> : vector<10x160xf32>
      %115 = tpu.matmul %112, %114, %cst_78 {dimension_numbers = #tpu.dot_dimension_numbers<[1], [0], [0], [1], [0, 0, 1, 1], [], []>} : vector<10x84xbf16>, vector<84x160xbf16>, vector<10x160xf32> -> vector<10x160xf32>
      %116 = arith.addf %110, %115 : vector<10x160xf32>
      %117 = vector.extract_strided_slice %96 {offsets = [3, 0], sizes = [10, 84], strides = [1, 1]} : vector<14x84xf32> to vector<10x84xf32>
      %118 = arith.truncf %117 : vector<10x84xf32> to vector<10x84xbf16>
      %c3_79 = arith.constant 3 : index
      %c0_80 = arith.constant 0 : index
      %c0_81 = arith.constant 0 : index
      %119 = vector.load %arg6[%c3_79, %c0_80, %c0_81] : memref<5x84x160xbf16, #tpu.memory_space<vmem>>, vector<1x84x160xbf16>
      %120 = vector.shape_cast %119 : vector<1x84x160xbf16> to vector<84x160xbf16>
      %cst_82 = arith.constant dense<0.000000e+00> : vector<10x160xf32>
      %121 = tpu.matmul %118, %120, %cst_82 {dimension_numbers = #tpu.dot_dimension_numbers<[1], [0], [0], [1], [0, 0, 1, 1], [], []>} : vector<10x84xbf16>, vector<84x160xbf16>, vector<10x160xf32> -> vector<10x160xf32>
      %122 = arith.addf %116, %121 : vector<10x160xf32>
      %123 = vector.extract_strided_slice %96 {offsets = [4, 0], sizes = [10, 84], strides = [1, 1]} : vector<14x84xf32> to vector<10x84xf32>
      %124 = arith.truncf %123 : vector<10x84xf32> to vector<10x84xbf16>
      %c4_83 = arith.constant 4 : index
      %c0_84 = arith.constant 0 : index
      %c0_85 = arith.constant 0 : index
      %125 = vector.load %arg6[%c4_83, %c0_84, %c0_85] : memref<5x84x160xbf16, #tpu.memory_space<vmem>>, vector<1x84x160xbf16>
      %126 = vector.shape_cast %125 : vector<1x84x160xbf16> to vector<84x160xbf16>
      %cst_86 = arith.constant dense<0.000000e+00> : vector<10x160xf32>
      %127 = tpu.matmul %124, %126, %cst_86 {dimension_numbers = #tpu.dot_dimension_numbers<[1], [0], [0], [1], [0, 0, 1, 1], [], []>} : vector<10x84xbf16>, vector<84x160xbf16>, vector<10x160xf32> -> vector<10x160xf32>
      %128 = arith.addf %122, %127 : vector<10x160xf32>
      %cst_87 = arith.constant 0.000000e+00 : f32
      %129 = vector.broadcast %cst_87 : f32 to vector<10x160xf32>
      %130 = arith.maximumf %128, %129 : vector<10x160xf32>
      %c0_88 = arith.constant 0 : index
      %c0_89 = arith.constant 0 : index
      %131 = vector.load %arg8[%c0_88, %c0_89] : memref<5x10xf32, #tpu.memory_space<vmem>>, vector<5x10xf32>
      %cst_90 = arith.constant dense<0.000000e+00> : vector<5x160xf32>
      %132 = tpu.matmul %131, %130, %cst_90 {dimension_numbers = #tpu.dot_dimension_numbers<[1], [0], [0], [1], [0, 0, 1, 1], [], []>} : vector<5x10xf32>, vector<10x160xf32>, vector<5x160xf32> -> vector<5x160xf32>
      %c0_91 = arith.constant 0 : index
      %c0_92 = arith.constant 0 : index
      %133 = vector.load %arg9[%c0_91, %c0_92] : memref<160x80xf32, #tpu.memory_space<vmem>>, vector<160x80xf32>
      %cst_93 = arith.constant dense<0.000000e+00> : vector<5x80xf32>
      %134 = tpu.matmul %132, %133, %cst_93 {dimension_numbers = #tpu.dot_dimension_numbers<[1], [0], [0], [1], [0, 0, 1, 1], [], []>} : vector<5x160xf32>, vector<160x80xf32>, vector<5x80xf32> -> vector<5x80xf32>
      %135 = arith.index_cast %arg18 : i32 to index
      %c0_94 = arith.constant 0 : index
      %c0_95 = arith.constant 0 : index
      %136 = vector.load %arg17[%135, %c0_94, %c0_95] : memref<8x5x80xf32, #tpu.memory_space<vmem>>, vector<1x5x80xf32>
      %137 = vector.shape_cast %136 : vector<1x5x80xf32> to vector<5x80xf32>
      %138 = vector.shape_cast %134 : vector<5x80xf32> to vector<1x5x80xf32>
      tpu.vector_store %arg17[%135, %c0_94, %c0_95], %138 {strides = array<i32>} : memref<8x5x80xf32, #tpu.memory_space<vmem>>, vector<1x5x80xf32>,
    }
    %c8_i32_0 = arith.constant 8 : i32
    %c0 = arith.constant 0 : index
    %c0_1 = arith.constant 0 : index
    %c0_2 = arith.constant 0 : index
    %1 = vector.load %arg17[%c0, %c0_1, %c0_2] : memref<8x5x80xf32, #tpu.memory_space<vmem>>, vector<8x5x80xf32>
    %2 = vector.extract_strided_slice %1 {offsets = [0, 0, 0], sizes = [8, 1, 80], strides = [1, 1, 1]} : vector<8x5x80xf32> to vector<8x1x80xf32>
    %3 = vector.shape_cast %2 : vector<8x1x80xf32> to vector<8x80xf32>
    %4 = arith.truncf %3 : vector<8x80xf32> to vector<8x80xbf16>
    %c0_3 = arith.constant 0 : index
    %c0_4 = arith.constant 0 : index
    %c0_5 = arith.constant 0 : index
    %5 = vector.load %arg10[%c0_3, %c0_4, %c0_5] : memref<5x80x120xbf16, #tpu.memory_space<vmem>>, vector<1x80x120xbf16>
    %6 = vector.shape_cast %5 : vector<1x80x120xbf16> to vector<80x120xbf16>
    %cst = arith.constant dense<0.000000e+00> : vector<8x120xf32>
    %7 = tpu.matmul %4, %6, %cst {dimension_numbers = #tpu.dot_dimension_numbers<[1], [0], [0], [1], [0, 0, 1, 1], [], []>} : vector<8x80xbf16>, vector<80x120xbf16>, vector<8x120xf32> -> vector<8x120xf32>
    %c0_6 = arith.constant 0 : index
    %c0_7 = arith.constant 0 : index
    %8 = vector.load %arg11[%c0_6, %c0_7] : memref<1x120xf32, #tpu.memory_space<vmem>>, vector<1x120xf32>
    %9 = vector.broadcast %8 : vector<1x120xf32> to vector<8x120xf32>
    %10 = arith.addf %7, %9 : vector<8x120xf32>
    %11 = vector.extract_strided_slice %1 {offsets = [0, 1, 0], sizes = [8, 1, 80], strides = [1, 1, 1]} : vector<8x5x80xf32> to vector<8x1x80xf32>
    %12 = vector.shape_cast %11 : vector<8x1x80xf32> to vector<8x80xf32>
    %13 = arith.truncf %12 : vector<8x80xf32> to vector<8x80xbf16>
    %c1 = arith.constant 1 : index
    %c0_8 = arith.constant 0 : index
    %c0_9 = arith.constant 0 : index
    %14 = vector.load %arg10[%c1, %c0_8, %c0_9] : memref<5x80x120xbf16, #tpu.memory_space<vmem>>, vector<1x80x120xbf16>
    %15 = vector.shape_cast %14 : vector<1x80x120xbf16> to vector<80x120xbf16>
    %cst_10 = arith.constant dense<0.000000e+00> : vector<8x120xf32>
    %16 = tpu.matmul %13, %15, %cst_10 {dimension_numbers = #tpu.dot_dimension_numbers<[1], [0], [0], [1], [0, 0, 1, 1], [], []>} : vector<8x80xbf16>, vector<80x120xbf16>, vector<8x120xf32> -> vector<8x120xf32>
    %17 = arith.addf %10, %16 : vector<8x120xf32>
    %18 = vector.extract_strided_slice %1 {offsets = [0, 2, 0], sizes = [8, 1, 80], strides = [1, 1, 1]} : vector<8x5x80xf32> to vector<8x1x80xf32>
    %19 = vector.shape_cast %18 : vector<8x1x80xf32> to vector<8x80xf32>
    %20 = arith.truncf %19 : vector<8x80xf32> to vector<8x80xbf16>
    %c2 = arith.constant 2 : index
    %c0_11 = arith.constant 0 : index
    %c0_12 = arith.constant 0 : index
    %21 = vector.load %arg10[%c2, %c0_11, %c0_12] : memref<5x80x120xbf16, #tpu.memory_space<vmem>>, vector<1x80x120xbf16>
    %22 = vector.shape_cast %21 : vector<1x80x120xbf16> to vector<80x120xbf16>
    %cst_13 = arith.constant dense<0.000000e+00> : vector<8x120xf32>
    %23 = tpu.matmul %20, %22, %cst_13 {dimension_numbers = #tpu.dot_dimension_numbers<[1], [0], [0], [1], [0, 0, 1, 1], [], []>} : vector<8x80xbf16>, vector<80x120xbf16>, vector<8x120xf32> -> vector<8x120xf32>
    %24 = arith.addf %17, %23 : vector<8x120xf32>
    %25 = vector.extract_strided_slice %1 {offsets = [0, 3, 0], sizes = [8, 1, 80], strides = [1, 1, 1]} : vector<8x5x80xf32> to vector<8x1x80xf32>
    %26 = vector.shape_cast %25 : vector<8x1x80xf32> to vector<8x80xf32>
    %27 = arith.truncf %26 : vector<8x80xf32> to vector<8x80xbf16>
    %c3 = arith.constant 3 : index
    %c0_14 = arith.constant 0 : index
    %c0_15 = arith.constant 0 : index
    %28 = vector.load %arg10[%c3, %c0_14, %c0_15] : memref<5x80x120xbf16, #tpu.memory_space<vmem>>, vector<1x80x120xbf16>
    %29 = vector.shape_cast %28 : vector<1x80x120xbf16> to vector<80x120xbf16>
    %cst_16 = arith.constant dense<0.000000e+00> : vector<8x120xf32>
    %30 = tpu.matmul %27, %29, %cst_16 {dimension_numbers = #tpu.dot_dimension_numbers<[1], [0], [0], [1], [0, 0, 1, 1], [], []>} : vector<8x80xbf16>, vector<80x120xbf16>, vector<8x120xf32> -> vector<8x120xf32>
    %31 = arith.addf %24, %30 : vector<8x120xf32>
    %32 = vector.extract_strided_slice %1 {offsets = [0, 4, 0], sizes = [8, 1, 80], strides = [1, 1, 1]} : vector<8x5x80xf32> to vector<8x1x80xf32>
    %33 = vector.shape_cast %32 : vector<8x1x80xf32> to vector<8x80xf32>
    %34 = arith.truncf %33 : vector<8x80xf32> to vector<8x80xbf16>
    %c4 = arith.constant 4 : index
    %c0_17 = arith.constant 0 : index
    %c0_18 = arith.constant 0 : index
    %35 = vector.load %arg10[%c4, %c0_17, %c0_18] : memref<5x80x120xbf16, #tpu.memory_space<vmem>>, vector<1x80x120xbf16>
    %36 = vector.shape_cast %35 : vector<1x80x120xbf16> to vector<80x120xbf16>
    %cst_19 = arith.constant dense<0.000000e+00> : vector<8x120xf32>
    %37 = tpu.matmul %34, %36, %cst_19 {dimension_numbers = #tpu.dot_dimension_numbers<[1], [0], [0], [1], [0, 0, 1, 1], [], []>} : vector<8x80xbf16>, vector<80x120xbf16>, vector<8x120xf32> -> vector<8x120xf32>
    %38 = arith.addf %31, %37 : vector<8x120xf32>
    %cst_20 = arith.constant 0.000000e+00 : f32
    %39 = vector.broadcast %cst_20 : f32 to vector<8x120xf32>
    %40 = arith.maximumf %38, %39 : vector<8x120xf32>
    %41 = arith.truncf %40 : vector<8x120xf32> to vector<8x120xbf16>
    %c0_21 = arith.constant 0 : index
    %c0_22 = arith.constant 0 : index
    %42 = vector.load %arg12[%c0_21, %c0_22] : memref<120x84xbf16, #tpu.memory_space<vmem>>, vector<120x84xbf16>
    %cst_23 = arith.constant dense<0.000000e+00> : vector<8x84xf32>
    %43 = tpu.matmul %41, %42, %cst_23 {dimension_numbers = #tpu.dot_dimension_numbers<[1], [0], [0], [1], [0, 0, 1, 1], [], []>} : vector<8x120xbf16>, vector<120x84xbf16>, vector<8x84xf32> -> vector<8x84xf32>
    %c0_24 = arith.constant 0 : index
    %c0_25 = arith.constant 0 : index
    %44 = vector.load %arg13[%c0_24, %c0_25] : memref<1x84xf32, #tpu.memory_space<vmem>>, vector<1x84xf32>
    %45 = vector.broadcast %44 : vector<1x84xf32> to vector<8x84xf32>
    %46 = arith.addf %43, %45 : vector<8x84xf32>
    %cst_26 = arith.constant 0.000000e+00 : f32
    %47 = vector.broadcast %cst_26 : f32 to vector<8x84xf32>
    %48 = arith.maximumf %46, %47 : vector<8x84xf32>
    %49 = arith.truncf %48 : vector<8x84xf32> to vector<8x84xbf16>
    %c0_27 = arith.constant 0 : index
    %c0_28 = arith.constant 0 : index
    %50 = vector.load %arg14[%c0_27, %c0_28] : memref<84x128xbf16, #tpu.memory_space<vmem>>, vector<84x128xbf16>
    %cst_29 = arith.constant dense<0.000000e+00> : vector<8x128xf32>
    %51 = tpu.matmul %49, %50, %cst_29 {dimension_numbers = #tpu.dot_dimension_numbers<[1], [0], [0], [1], [0, 0, 1, 1], [], []>} : vector<8x84xbf16>, vector<84x128xbf16>, vector<8x128xf32> -> vector<8x128xf32>
    %c0_30 = arith.constant 0 : index
    %c0_31 = arith.constant 0 : index
    %52 = vector.load %arg15[%c0_30, %c0_31] : memref<1x128xf32, #tpu.memory_space<vmem>>, vector<1x128xf32>
    %53 = vector.broadcast %52 : vector<1x128xf32> to vector<8x128xf32>
    %54 = arith.addf %51, %53 : vector<8x128xf32>
    %c0_32 = arith.constant 0 : index
    %c0_33 = arith.constant 0 : index
    %55 = vector.load %arg16[%c0_32, %c0_33] : memref<8x128xf32, #tpu.memory_space<vmem>>, vector<8x128xf32>
    tpu.vector_store %arg16[%c0_32, %c0_33], %54 {strides = array<i32>} : memref<8x128xf32, #tpu.memory_space<vmem>>, vector<8x128xf32>,
    return
  }
  func.func @transform_0(%arg0: i32) -> (i32, i32, i32) {
    %c0_i32 = arith.constant 0 : i32
    %c0_i32_0 = arith.constant 0 : i32
    %c0_i32_1 = arith.constant 0 : i32
    return %arg0, %c0_i32, %c0_i32_0 : i32, i32, i32
  }
  func.func @transform_1(%arg0: i32) -> (i32, i32, i32) {
    %c0_i32 = arith.constant 0 : i32
    %c0_i32_0 = arith.constant 0 : i32
    %c0_i32_1 = arith.constant 0 : i32
    %c0_i32_2 = arith.constant 0 : i32
    return %c0_i32, %c0_i32_0, %c0_i32_1 : i32, i32, i32
  }
  func.func @transform_2(%arg0: i32) -> (i32, i32) {
    %c0_i32 = arith.constant 0 : i32
    %c0_i32_0 = arith.constant 0 : i32
    %c0_i32_1 = arith.constant 0 : i32
    return %c0_i32, %c0_i32_0 : i32, i32
  }
  func.func @transform_3(%arg0: i32) -> (i32, i32) {
    %c0_i32 = arith.constant 0 : i32
    %c0_i32_0 = arith.constant 0 : i32
    %c0_i32_1 = arith.constant 0 : i32
    return %c0_i32, %c0_i32_0 : i32, i32
  }
  func.func @transform_4(%arg0: i32) -> (i32, i32) {
    %c0_i32 = arith.constant 0 : i32
    %c0_i32_0 = arith.constant 0 : i32
    %c0_i32_1 = arith.constant 0 : i32
    return %c0_i32, %c0_i32_0 : i32, i32
  }
  func.func @transform_5(%arg0: i32) -> (i32, i32, i32) {
    %c0_i32 = arith.constant 0 : i32
    %c0_i32_0 = arith.constant 0 : i32
    %c0_i32_1 = arith.constant 0 : i32
    %c0_i32_2 = arith.constant 0 : i32
    return %c0_i32, %c0_i32_0, %c0_i32_1 : i32, i32, i32
  }
  func.func @transform_6(%arg0: i32) -> (i32, i32) {
    %c0_i32 = arith.constant 0 : i32
    %c0_i32_0 = arith.constant 0 : i32
    %c0_i32_1 = arith.constant 0 : i32
    return %c0_i32, %c0_i32_0 : i32, i32
  }
  func.func @transform_7(%arg0: i32) -> (i32, i32) {
    %c0_i32 = arith.constant 0 : i32
    %c0_i32_0 = arith.constant 0 : i32
    %c0_i32_1 = arith.constant 0 : i32
    return %c0_i32, %c0_i32_0 : i32, i32
  }
  func.func @transform_8(%arg0: i32) -> (i32, i32) {
    %c0_i32 = arith.constant 0 : i32
    %c0_i32_0 = arith.constant 0 : i32
    %c0_i32_1 = arith.constant 0 : i32
    return %c0_i32, %c0_i32_0 : i32, i32
  }
  func.func @transform_9(%arg0: i32) -> (i32, i32, i32) {
    %c0_i32 = arith.constant 0 : i32
    %c0_i32_0 = arith.constant 0 : i32
    %c0_i32_1 = arith.constant 0 : i32
    %c0_i32_2 = arith.constant 0 : i32
    return %c0_i32, %c0_i32_0, %c0_i32_1 : i32, i32, i32
  }
  func.func @transform_10(%arg0: i32) -> (i32, i32) {
    %c0_i32 = arith.constant 0 : i32
    %c0_i32_0 = arith.constant 0 : i32
    %c0_i32_1 = arith.constant 0 : i32
    return %c0_i32, %c0_i32_0 : i32, i32
  }
  func.func @transform_11(%arg0: i32) -> (i32, i32) {
    %c0_i32 = arith.constant 0 : i32
    %c0_i32_0 = arith.constant 0 : i32
    %c0_i32_1 = arith.constant 0 : i32
    return %c0_i32, %c0_i32_0 : i32, i32
  }
  func.func @transform_12(%arg0: i32) -> (i32, i32) {
    %c0_i32 = arith.constant 0 : i32
    %c0_i32_0 = arith.constant 0 : i32
    %c0_i32_1 = arith.constant 0 : i32
    return %c0_i32, %c0_i32_0 : i32, i32
  }
  func.func @transform_13(%arg0: i32) -> (i32, i32) {
    %c0_i32 = arith.constant 0 : i32
    %c0_i32_0 = arith.constant 0 : i32
    %c0_i32_1 = arith.constant 0 : i32
    return %c0_i32, %c0_i32_0 : i32, i32
  }
  func.func @transform_14(%arg0: i32) -> (i32, i32) {
    %c0_i32 = arith.constant 0 : i32
    %c0_i32_0 = arith.constant 0 : i32
    %c0_i32_1 = arith.constant 0 : i32
    return %c0_i32, %c0_i32_0 : i32, i32
  }
  func.func @transform_15(%arg0: i32) -> (i32, i32) {
    %c0_i32 = arith.constant 0 : i32
    %c0_i32_0 = arith.constant 0 : i32
    return %arg0, %c0_i32 : i32, i32
  }
}

</mosaic_0001>

<llo_original>
// kernel: my_model_forward.1
$region0: #{my_model_forward.1}
  #allocation0 [shape = 'u32[]', space=smem, size = 0x4, offset = 0x4, fixed_abs, tag = 'smem constant byte address 0x4 - core index']
  #allocation1 [shape = 'u32[72,128]{1,0:T(1,128)}', space=vmem, size = 0x9000, scoped, tag = 'internal scratch']
  #allocation2 [shape = 'f32[8,5,80]{2,1,0:T(8,128)}', space=vmem, size = 0x8000, scoped, tag = 'scratch operand']
  %s0 = inlined_call_operand.vmem [shape: f32[8,32,32], index: 0, kind: input, shape index: {}]
  %s1 = inlined_call_operand.vmem [shape: bf16[5,32,168], index: 1, kind: input, shape index: {}]
  %s2 = inlined_call_operand.vmem [shape: f32[1,168], index: 2, kind: input, shape index: {}]
  %s3 = inlined_call_operand.vmem [shape: f32[14,28], index: 3, kind: input, shape index: {}]
  %s4 = inlined_call_operand.vmem [shape: f32[168,84], index: 4, kind: input, shape index: {}]
  %s5 = inlined_call_operand.vmem [shape: bf16[5,84,160], index: 5, kind: input, shape index: {}]
  %s6 = inlined_call_operand.vmem [shape: f32[1,160], index: 6, kind: input, shape index: {}]
  %s7 = inlined_call_operand.vmem [shape: f32[5,10], index: 7, kind: input, shape index: {}]
  %s8 = inlined_call_operand.vmem [shape: f32[160,80], index: 8, kind: input, shape index: {}]
  %s9 = inlined_call_operand.vmem [shape: bf16[5,80,120], index: 9, kind: input, shape index: {}]
  %s10 = inlined_call_operand.vmem [shape: f32[1,120], index: 10, kind: input, shape index: {}]
  %s11 = inlined_call_operand.vmem [shape: bf16[120,84], index: 11, kind: input, shape index: {}]
  %s12 = inlined_call_operand.vmem [shape: f32[1,84], index: 12, kind: input, shape index: {}]
  %s13 = inlined_call_operand.vmem [shape: bf16[84,128], index: 13, kind: input, shape index: {}]
  %s14 = inlined_call_operand.vmem [shape: f32[1,128], index: 14, kind: input, shape index: {}]
  %s15 = inlined_call_operand.vmem [shape: f32[8,128], index: 15, kind: output, shape index: {}]
  %s16 = sld [smem:[#allocation0]]
  $region77: #{my_model_forward.1} parent=0
    _
  %s18 = ssub.s32 1, %s16
  %s19 = scalar_select 0, %s18, %s16
  // Predicated region
  $region2: #{my_model_forward.1} parent=0 // pred_check
    _
  $region3: #{my_model_forward.1} parent=0 // pred_check_branch
    %21 = sbr.rel (0) target = $region5
  $region4: #{my_model_forward.1} parent=0 // pred_region
    _
  $region5: #{my_model_forward.1} parent=0 // pred_fallthru
    _
  // Predicated region
  $region6: #{my_model_forward.1} parent=0 // pred_check
    _
  $region7: #{my_model_forward.1} parent=0 // pred_check_branch
    %23 = sbr.rel (0) target = $region9
  $region8: #{my_model_forward.1} parent=0 // pred_region
    _
  $region9: #{my_model_forward.1} parent=0 // pred_fallthru
    _
  // Predicated region
  $region10: #{my_model_forward.1} parent=0 // pred_check
    _
  $region11: #{my_model_forward.1} parent=0 // pred_check_branch
    %25 = sbr.rel (0) target = $region13
  $region12: #{my_model_forward.1} parent=0 // pred_region
    _
  $region13: #{my_model_forward.1} parent=0 // pred_fallthru
    _
  // Predicated region
  $region14: #{my_model_forward.1} parent=0 // pred_check
    _
  $region15: #{my_model_forward.1} parent=0 // pred_check_branch
    %27 = sbr.rel (0) target = $region17
  $region16: #{my_model_forward.1} parent=0 // pred_region
    _
  $region17: #{my_model_forward.1} parent=0 // pred_fallthru
    _
  // Predicated region
  $region18: #{my_model_forward.1} parent=0 // pred_check
    _
  $region19: #{my_model_forward.1} parent=0 // pred_check_branch
    %29 = sbr.rel (0) target = $region21
  $region20: #{my_model_forward.1} parent=0 // pred_region
    _
  $region21: #{my_model_forward.1} parent=0 // pred_fallthru
    _
  // Predicated region
  $region22: #{my_model_forward.1} parent=0 // pred_check
    _
  $region23: #{my_model_forward.1} parent=0 // pred_check_branch
    %31 = sbr.rel (0) target = $region25
  $region24: #{my_model_forward.1} parent=0 // pred_region
    _
  $region25: #{my_model_forward.1} parent=0 // pred_fallthru
    _
  // Predicated region
  $region26: #{my_model_forward.1} parent=0 // pred_check
    _
  $region27: #{my_model_forward.1} parent=0 // pred_check_branch
    %33 = sbr.rel (0) target = $region29
  $region28: #{my_model_forward.1} parent=0 // pred_region
    _
  $region29: #{my_model_forward.1} parent=0 // pred_fallthru
    _
  // Predicated region
  $region30: #{my_model_forward.1} parent=0 // pred_check
    _
  $region31: #{my_model_forward.1} parent=0 // pred_check_branch
    %35 = sbr.rel (0) target = $region33
  $region32: #{my_model_forward.1} parent=0 // pred_region
    _
  $region33: #{my_model_forward.1} parent=0 // pred_fallthru
    _
  // Predicated region
  $region34: #{my_model_forward.1} parent=0 // pred_check
    _
  $region35: #{my_model_forward.1} parent=0 // pred_check_branch
    %37 = sbr.rel (0) target = $region37
  $region36: #{my_model_forward.1} parent=0 // pred_region
    _
  $region37: #{my_model_forward.1} parent=0 // pred_fallthru
    _
  // Predicated region
  $region38: #{my_model_forward.1} parent=0 // pred_check
    _
  $region39: #{my_model_forward.1} parent=0 // pred_check_branch
    %39 = sbr.rel (0) target = $region41
  $region40: #{my_model_forward.1} parent=0 // pred_region
    _
  $region41: #{my_model_forward.1} parent=0 // pred_fallthru
    _
  // Predicated region
  $region42: #{my_model_forward.1} parent=0 // pred_check
    _
  $region43: #{my_model_forward.1} parent=0 // pred_check_branch
    %41 = sbr.rel (0) target = $region45
  $region44: #{my_model_forward.1} parent=0 // pred_region
    _
  $region45: #{my_model_forward.1} parent=0 // pred_fallthru
    _
  // Predicated region
  $region46: #{my_model_forward.1} parent=0 // pred_check
    _
  $region47: #{my_model_forward.1} parent=0 // pred_check_branch
    %43 = sbr.rel (0) target = $region49
  $region48: #{my_model_forward.1} parent=0 // pred_region
    _
  $region49: #{my_model_forward.1} parent=0 // pred_fallthru
    _
  // Predicated region
  $region50: #{my_model_forward.1} parent=0 // pred_check
    _
  $region51: #{my_model_forward.1} parent=0 // pred_check_branch
    %45 = sbr.rel (0) target = $region53
  $region52: #{my_model_forward.1} parent=0 // pred_region
    _
  $region53: #{my_model_forward.1} parent=0 // pred_fallthru
    _
  // Predicated region
  $region54: #{my_model_forward.1} parent=0 // pred_check
    _
  $region55: #{my_model_forward.1} parent=0 // pred_check_branch
    %47 = sbr.rel (0) target = $region57
  $region56: #{my_model_forward.1} parent=0 // pred_region
    _
  $region57: #{my_model_forward.1} parent=0 // pred_fallthru
    _
  // Predicated region
  $region58: #{my_model_forward.1} parent=0 // pred_check
    _
  $region59: #{my_model_forward.1} parent=0 // pred_check_branch
    %49 = sbr.rel (0) target = $region61
  $region60: #{my_model_forward.1} parent=0 // pred_region
    _
  $region61: #{my_model_forward.1} parent=0 // pred_fallthru
    _
  loop: start=0, step=1, limit=8
  $region62: #{my_model_forward.1} parent=0 // loop_pre_header
    _
  $region63: #{my_model_forward.1} parent=0 // loop_header
    %s52 = sphi 0, %s56
    %p53 = scmp.ge.s32.totalorder %s52, 8
  $region64: #{my_model_forward.1} parent=0 // loop_header_branch
    %55 = sbr.rel (%p53) target = $region68
  $region65: #{my_model_forward.1} parent=0 // loop_body
    %s57 = smul.u32 %s52, 32
    %s58 = scalar_lea.vmem %s0, %s57
    %v59 = vld [vmem:[%s58] sm:$0xff]
    %v60 = vld [vmem:[%s58 + $0x8] sm:$0xff]
    %v61 = vld [vmem:[%s58 + $0x10] sm:$0xff]
    %v62 = vld [vmem:[%s58 + $0x18] sm:$0xff]
    %v63 = vpack.c.bf16 %v60, %v59
    %v64 = vpack.c.bf16 %v62, %v61
    %v65 = vld [vmem:[%s1] sm:$0xff]
    %v66 = vld [vmem:[%s1 + $0x8] sm:$0xff]
    %v67 = vld [vmem:[%s1 + $0x10] sm:$0xff]
    %v68 = vld [vmem:[%s1 + $0x18] sm:$0xff]
    %v69 = vld [vmem:[%s2] sm:$0x3]
    %v71 = vperm.slane %v69, 0
    %v72 = vperm.slane %v69, 1
    %v79 = vunpack.c.l.b16 %v65
    %v80 = vunpack.c.h.b16 %v65
    %v81 = vunpack.c.l.b16 %v66
    %v82 = vunpack.c.h.b16 %v66
    %v83 = vunpack.c.l.b16 %v67
    %v84 = vunpack.c.h.b16 %v67
    %v85 = vunpack.c.l.b16 %v68
    %v86 = vunpack.c.h.b16 %v68
    %v87 = vpack.c.b16 %v81, %v79
    %v88 = vpack.c.b16 %v82, %v80
    %v89 = vpack.c.b16 %v85, %v83
    %v90 = vpack.c.b16 %v86, %v84
    %vm95 = vcmask 261120
    %v97 = vsel %vm95, %v63, 0
    %v100 = vsel %vm95, %v64, 0
    %102 = vmatpush.bf16.msra.mxu0 0
    %103 = vmatpush.bf16.msra.mxu0 0
    %104 = vmatpush.bf16.msra.mxu0 0
    %105 = vmatpush.bf16.msra.mxu0 0
    %106 = vmatpush.bf16.msra.mxu0 0
    %107 = vmatpush.bf16.msra.mxu0 0
    %108 = vmatpush.bf16.msra.mxu0 %v89
    %109 = vmatpush.bf16.msra.mxu0 %v87
    %110 = vmatmul.bf16.gmra.mxu0 %v97
    %v111 = vpop.f32.mrf.mxu0
    %v112 = vadd.f32 %v71, %v111
    %v113 = vpop.f32.mrf.mxu0
    %v114 = vadd.f32 %v71, %v113
    %115 = vmatmul.bf16.gmra.mxu0 %v100
    %v116 = vpop.f32.mrf.mxu0
    %v117 = vadd.f32 %v71, %v116
    %v118 = vpop.f32.mrf.mxu0
    %v119 = vadd.f32 %v71, %v118
    %120 = vdwg.mxu0
    %121 = vmatpush.bf16.msra.mxu0 0
    %122 = vmatpush.bf16.msra.mxu0 0
    %123 = vmatpush.bf16.msra.mxu0 0
    %124 = vmatpush.bf16.msra.mxu0 0
    %125 = vmatpush.bf16.msra.mxu0 0
    %126 = vmatpush.bf16.msra.mxu0 0
    %127 = vmatpush.bf16.msra.mxu0 %v90
    %128 = vmatpush.bf16.msra.mxu0 %v88
    %129 = vmatmul.bf16.gmra.mxu0 %v97
    %v130 = vpop.f32.mrf.mxu0
    %v131 = vadd.f32 %v72, %v130
    %v132 = vpop.f32.mrf.mxu0
    %v133 = vadd.f32 %v72, %v132
    %134 = vmatmul.bf16.gmra.mxu0 %v100
    %v135 = vpop.f32.mrf.mxu0
    %v136 = vadd.f32 %v72, %v135
    %v137 = vpop.f32.mrf.mxu0
    %v138 = vadd.f32 %v72, %v137
    %139 = vdwg.mxu0
    %s140 = scalar_lea.vmem %s1, 32
    %v141 = vld [vmem:[%s140] sm:$0xff]
    %v142 = vld [vmem:[%s140 + $0x8] sm:$0xff]
    %v143 = vld [vmem:[%s140 + $0x10] sm:$0xff]
    %v144 = vld [vmem:[%s140 + $0x18] sm:$0xff]
    %vm145 = vsmask.f32 7424
    %v146 = vshrl.u32 %v63, 16
    %v148 = vshll.u32 %v63, 16
    %v150 = vrot.slane %v148, 1
    %v151 = vor.u32 %v146, %v150
    %v152 = vshll.u32 %v64, 16
    %v154 = vrot.slane %v152, 1
    %v155 = vsel %vm145, %v151, %v154
    %v156 = vshrl.u32 %v64, 16
    %v158 = vor.u32 %v156, %v154
    %v163 = vunpack.c.l.b16 %v141
    %v164 = vunpack.c.h.b16 %v141
    %v165 = vunpack.c.l.b16 %v142
    %v166 = vunpack.c.h.b16 %v142
    %v167 = vunpack.c.l.b16 %v143
    %v168 = vunpack.c.h.b16 %v143
    %v169 = vunpack.c.l.b16 %v144
    %v170 = vunpack.c.h.b16 %v144
    %v171 = vpack.c.b16 %v165, %v163
    %v172 = vpack.c.b16 %v166, %v164
    %v173 = vpack.c.b16 %v169, %v167
    %v174 = vpack.c.b16 %v170, %v168
    %v180 = vsel %vm95, %v155, 0
    %v183 = vsel %vm95, %v158, 0
    %185 = vmatpush.bf16.msra.mxu0 0
    %186 = vmatpush.bf16.msra.mxu0 0
    %187 = vmatpush.bf16.msra.mxu0 0
    %188 = vmatpush.bf16.msra.mxu0 0
    %189 = vmatpush.bf16.msra.mxu0 0
    %190 = vmatpush.bf16.msra.mxu0 0
    %191 = vmatpush.bf16.msra.mxu0 %v173
    %192 = vmatpush.bf16.msra.mxu0 %v171
    %193 = vmatmul.bf16.gmra.mxu0 %v180
    %v194 = vpop.f32.mrf.mxu0
    %v195 = vadd.f32 0.0, %v194
    %v196 = vpop.f32.mrf.mxu0
    %v197 = vadd.f32 0.0, %v196
    %198 = vmatmul.bf16.gmra.mxu0 %v183
    %v199 = vpop.f32.mrf.mxu0
    %v200 = vadd.f32 0.0, %v199
    %v201 = vpop.f32.mrf.mxu0
    %v202 = vadd.f32 0.0, %v201
    %203 = vdwg.mxu0
    %204 = vmatpush.bf16.msra.mxu0 0
    %205 = vmatpush.bf16.msra.mxu0 0
    %206 = vmatpush.bf16.msra.mxu0 0
    %207 = vmatpush.bf16.msra.mxu0 0
    %208 = vmatpush.bf16.msra.mxu0 0
    %209 = vmatpush.bf16.msra.mxu0 0
    %210 = vmatpush.bf16.msra.mxu0 %v174
    %211 = vmatpush.bf16.msra.mxu0 %v172
    %212 = vmatmul.bf16.gmra.mxu0 %v180
    %v213 = vpop.f32.mrf.mxu0
    %v214 = vadd.f32 0.0, %v213
    %v215 = vpop.f32.mrf.mxu0
    %v216 = vadd.f32 0.0, %v215
    %217 = vmatmul.bf16.gmra.mxu0 %v183
    %v218 = vpop.f32.mrf.mxu0
    %v219 = vadd.f32 0.0, %v218
    %v220 = vpop.f32.mrf.mxu0
    %v221 = vadd.f32 0.0, %v220
    %222 = vdwg.mxu0
    %v223 = vadd.f32 %v112, %v195
    %v224 = vadd.f32 %v131, %v214
    %v225 = vadd.f32 %v114, %v197
    %v226 = vadd.f32 %v133, %v216
    %v227 = vadd.f32 %v117, %v200
    %v228 = vadd.f32 %v136, %v219
    %v229 = vadd.f32 %v119, %v202
    %v230 = vadd.f32 %v138, %v221
    %s231 = scalar_lea.vmem %s1, 64
    %v232 = vld [vmem:[%s231] sm:$0xff]
    %v233 = vld [vmem:[%s231 + $0x8] sm:$0xff]
    %v234 = vld [vmem:[%s231 + $0x10] sm:$0xff]
    %v235 = vld [vmem:[%s231 + $0x18] sm:$0xff]
    %vm238 = vcmask 1046528
    %v239 = vrot.slane %v63, 1
    %v240 = vrot.slane %v64, 1
    %v241 = vsel %vm238, %v239, %v240
    %v246 = vunpack.c.l.b16 %v232
    %v247 = vunpack.c.h.b16 %v232
    %v248 = vunpack.c.l.b16 %v233
    %v249 = vunpack.c.h.b16 %v233
    %v250 = vunpack.c.l.b16 %v234
    %v251 = vunpack.c.h.b16 %v234
    %v252 = vunpack.c.l.b16 %v235
    %v253 = vunpack.c.h.b16 %v235
    %v254 = vpack.c.b16 %v248, %v246
    %v255 = vpack.c.b16 %v249, %v247
    %v256 = vpack.c.b16 %v252, %v250
    %v257 = vpack.c.b16 %v253, %v251
    %v263 = vsel %vm95, %v241, 0
    %v266 = vsel %vm95, %v240, 0
    %268 = vmatpush.bf16.msra.mxu0 0
    %269 = vmatpush.bf16.msra.mxu0 0
    %270 = vmatpush.bf16.msra.mxu0 0
    %271 = vmatpush.bf16.msra.mxu0 0
    %272 = vmatpush.bf16.msra.mxu0 0
    %273 = vmatpush.bf16.msra.mxu0 0
    %274 = vmatpush.bf16.msra.mxu0 %v256
    %275 = vmatpush.bf16.msra.mxu0 %v254
    %276 = vmatmul.bf16.gmra.mxu0 %v263
    %v277 = vpop.f32.mrf.mxu0
    %v278 = vadd.f32 0.0, %v277
    %v279 = vpop.f32.mrf.mxu0
    %v280 = vadd.f32 0.0, %v279
    %281 = vmatmul.bf16.gmra.mxu0 %v266
    %v282 = vpop.f32.mrf.mxu0
    %v283 = vadd.f32 0.0, %v282
    %v284 = vpop.f32.mrf.mxu0
    %v285 = vadd.f32 0.0, %v284
    %286 = vdwg.mxu0
    %287 = vmatpush.bf16.msra.mxu0 0
    %288 = vmatpush.bf16.msra.mxu0 0
    %289 = vmatpush.bf16.msra.mxu0 0
    %290 = vmatpush.bf16.msra.mxu0 0
    %291 = vmatpush.bf16.msra.mxu0 0
    %292 = vmatpush.bf16.msra.mxu0 0
    %293 = vmatpush.bf16.msra.mxu0 %v257
    %294 = vmatpush.bf16.msra.mxu0 %v255
    %295 = vmatmul.bf16.gmra.mxu0 %v263
    %v296 = vpop.f32.mrf.mxu0
    %v297 = vadd.f32 0.0, %v296
    %v298 = vpop.f32.mrf.mxu0
    %v299 = vadd.f32 0.0, %v298
    %300 = vmatmul.bf16.gmra.mxu0 %v266
    %v301 = vpop.f32.mrf.mxu0
    %v302 = vadd.f32 0.0, %v301
    %v303 = vpop.f32.mrf.mxu0
    %v304 = vadd.f32 0.0, %v303
    %305 = vdwg.mxu0
    %v306 = vadd.f32 %v223, %v278
    %v307 = vadd.f32 %v224, %v297
    %v308 = vadd.f32 %v225, %v280
    %v309 = vadd.f32 %v226, %v299
    %v310 = vadd.f32 %v227, %v283
    %v311 = vadd.f32 %v228, %v302
    %v312 = vadd.f32 %v229, %v285
    %v313 = vadd.f32 %v230, %v304
    %s314 = scalar_lea.vmem %s1, 96
    %v315 = vld [vmem:[%s314] sm:$0xff]
    %v316 = vld [vmem:[%s314 + $0x8] sm:$0xff]
    %v317 = vld [vmem:[%s314 + $0x10] sm:$0xff]
    %v318 = vld [vmem:[%s314 + $0x18] sm:$0xff]
    %vm319 = vsmask.f32 6400
    %v320 = vrot.slane %v146, 1
    %v321 = vrot.slane %v148, 2
    %v322 = vor.u32 %v320, %v321
    %v323 = vrot.slane %v156, 1
    %v324 = vrot.slane %v152, 2
    %v325 = vor.u32 %v323, %v324
    %v326 = vsel %vm319, %v322, %v325
    %v331 = vunpack.c.l.b16 %v315
    %v332 = vunpack.c.h.b16 %v315
    %v333 = vunpack.c.l.b16 %v316
    %v334 = vunpack.c.h.b16 %v316
    %v335 = vunpack.c.l.b16 %v317
    %v336 = vunpack.c.h.b16 %v317
    %v337 = vunpack.c.l.b16 %v318
    %v338 = vunpack.c.h.b16 %v318
    %v339 = vpack.c.b16 %v333, %v331
    %v340 = vpack.c.b16 %v334, %v332
    %v341 = vpack.c.b16 %v337, %v335
    %v342 = vpack.c.b16 %v338, %v336
    %v348 = vsel %vm95, %v326, 0
    %v351 = vsel %vm95, %v325, 0
    %353 = vmatpush.bf16.msra.mxu0 0
    %354 = vmatpush.bf16.msra.mxu0 0
    %355 = vmatpush.bf16.msra.mxu0 0
    %356 = vmatpush.bf16.msra.mxu0 0
    %357 = vmatpush.bf16.msra.mxu0 0
    %358 = vmatpush.bf16.msra.mxu0 0
    %359 = vmatpush.bf16.msra.mxu0 %v341
    %360 = vmatpush.bf16.msra.mxu0 %v339
    %361 = vmatmul.bf16.gmra.mxu0 %v348
    %v362 = vpop.f32.mrf.mxu0
    %v363 = vadd.f32 0.0, %v362
    %v364 = vpop.f32.mrf.mxu0
    %v365 = vadd.f32 0.0, %v364
    %366 = vmatmul.bf16.gmra.mxu0 %v351
    %v367 = vpop.f32.mrf.mxu0
    %v368 = vadd.f32 0.0, %v367
    %v369 = vpop.f32.mrf.mxu0
    %v370 = vadd.f32 0.0, %v369
    %371 = vdwg.mxu0
    %372 = vmatpush.bf16.msra.mxu0 0
    %373 = vmatpush.bf16.msra.mxu0 0
    %374 = vmatpush.bf16.msra.mxu0 0
    %375 = vmatpush.bf16.msra.mxu0 0
    %376 = vmatpush.bf16.msra.mxu0 0
    %377 = vmatpush.bf16.msra.mxu0 0
    %378 = vmatpush.bf16.msra.mxu0 %v342
    %379 = vmatpush.bf16.msra.mxu0 %v340
    %380 = vmatmul.bf16.gmra.mxu0 %v348
    %v381 = vpop.f32.mrf.mxu0
    %v382 = vadd.f32 0.0, %v381
    %v383 = vpop.f32.mrf.mxu0
    %v384 = vadd.f32 0.0, %v383
    %385 = vmatmul.bf16.gmra.mxu0 %v351
    %v386 = vpop.f32.mrf.mxu0
    %v387 = vadd.f32 0.0, %v386
    %v388 = vpop.f32.mrf.mxu0
    %v389 = vadd.f32 0.0, %v388
    %390 = vdwg.mxu0
    %v391 = vadd.f32 %v306, %v363
    %v392 = vadd.f32 %v307, %v382
    %v393 = vadd.f32 %v308, %v365
    %v394 = vadd.f32 %v309, %v384
    %v395 = vadd.f32 %v310, %v368
    %v396 = vadd.f32 %v311, %v387
    %v397 = vadd.f32 %v312, %v370
    %v398 = vadd.f32 %v313, %v389
    %s399 = scalar_lea.vmem %s1, 128
    %v400 = vld [vmem:[%s399] sm:$0xff]
    %v401 = vld [vmem:[%s399 + $0x8] sm:$0xff]
    %v402 = vld [vmem:[%s399 + $0x10] sm:$0xff]
    %v403 = vld [vmem:[%s399 + $0x18] sm:$0xff]
    %vm404 = vcmask 1045504
    %v405 = vrot.slane %v63, 2
    %v406 = vrot.slane %v64, 2
    %v407 = vsel %vm404, %v405, %v406
    %v412 = vunpack.c.l.b16 %v400
    %v413 = vunpack.c.h.b16 %v400
    %v414 = vunpack.c.l.b16 %v401
    %v415 = vunpack.c.h.b16 %v401
    %v416 = vunpack.c.l.b16 %v402
    %v417 = vunpack.c.h.b16 %v402
    %v418 = vunpack.c.l.b16 %v403
    %v419 = vunpack.c.h.b16 %v403
    %v420 = vpack.c.b16 %v414, %v412
    %v421 = vpack.c.b16 %v415, %v413
    %v422 = vpack.c.b16 %v418, %v416
    %v423 = vpack.c.b16 %v419, %v417
    %v429 = vsel %vm95, %v407, 0
    %v432 = vsel %vm95, %v406, 0
    %434 = vmatpush.bf16.msra.mxu0 0
    %435 = vmatpush.bf16.msra.mxu0 0
    %436 = vmatpush.bf16.msra.mxu0 0
    %437 = vmatpush.bf16.msra.mxu0 0
    %438 = vmatpush.bf16.msra.mxu0 0
    %439 = vmatpush.bf16.msra.mxu0 0
    %440 = vmatpush.bf16.msra.mxu0 %v422
    %441 = vmatpush.bf16.msra.mxu0 %v420
    %442 = vmatmul.bf16.gmra.mxu0 %v429
    %v443 = vpop.f32.mrf.mxu0
    %v444 = vadd.f32 0.0, %v443
    %v445 = vpop.f32.mrf.mxu0
    %v446 = vadd.f32 0.0, %v445
    %447 = vmatmul.bf16.gmra.mxu0 %v432
    %v448 = vpop.f32.mrf.mxu0
    %v449 = vadd.f32 0.0, %v448
    %v450 = vpop.f32.mrf.mxu0
    %v451 = vadd.f32 0.0, %v450
    %452 = vdwg.mxu0
    %453 = vmatpush.bf16.msra.mxu0 0
    %454 = vmatpush.bf16.msra.mxu0 0
    %455 = vmatpush.bf16.msra.mxu0 0
    %456 = vmatpush.bf16.msra.mxu0 0
    %457 = vmatpush.bf16.msra.mxu0 0
    %458 = vmatpush.bf16.msra.mxu0 0
    %459 = vmatpush.bf16.msra.mxu0 %v423
    %460 = vmatpush.bf16.msra.mxu0 %v421
    %461 = vmatmul.bf16.gmra.mxu0 %v429
    %v462 = vpop.f32.mrf.mxu0
    %v463 = vadd.f32 0.0, %v462
    %v464 = vpop.f32.mrf.mxu0
    %v465 = vadd.f32 0.0, %v464
    %466 = vmatmul.bf16.gmra.mxu0 %v432
    %v467 = vpop.f32.mrf.mxu0
    %v468 = vadd.f32 0.0, %v467
    %v469 = vpop.f32.mrf.mxu0
    %v470 = vadd.f32 0.0, %v469
    %471 = vdwg.mxu0
    %v472 = vadd.f32 %v391, %v444
    %v473 = vadd.f32 %v392, %v463
    %v474 = vadd.f32 %v393, %v446
    %v475 = vadd.f32 %v394, %v465
    %v476 = vadd.f32 %v395, %v449
    %v477 = vadd.f32 %v396, %v468
    %v478 = vadd.f32 %v397, %v451
    %v479 = vadd.f32 %v398, %v470
    %v480 = vmax.f32 %v472, 0.0
    %v481 = vmax.f32 %v473, 0.0
    %v482 = vmax.f32 %v474, 0.0
    %v483 = vmax.f32 %v475, 0.0
    %v484 = vmax.f32 %v476, 0.0
    %v485 = vmax.f32 %v477, 0.0
    %v486 = vmax.f32 %v478, 0.0
    %v487 = vmax.f32 %v479, 0.0
    %v488 = vld [vmem:[%s3] sm:$0xff]
    %v489 = vld [vmem:[%s3 + $0x8] sm:$0x3f]
    %vm490 = vcmask 228352
    %v492 = vsel %vm490, %v488, 0
    %v495 = vsel %vm490, %v489, 0
    %vm497 = vcmask 1043456
    %v499 = vsel %vm497, %v486, 0
    %v502 = vsel %vm497, %v487, 0
    %504 = vmatpush.msra.mxu0 0.0
    %505 = vmatpush.msra.mxu0 0.0
    %506 = vmatpush.msra.mxu0 0.0
    %507 = vmatpush.msra.mxu0 0.0
    %508 = vmatpush.msra.mxu0 0.0
    %509 = vmatpush.msra.mxu0 0.0
    %510 = vmatpush.msra.mxu0 0.0
    %511 = vmatpush.msra.mxu0 0.0
    %512 = vmatpush.msra.mxu0 0.0
    %513 = vmatpush.msra.mxu0 0.0
    %514 = vmatpush.msra.mxu0 0.0
    %515 = vmatpush.msra.mxu0 0.0
    %516 = vmatpush.msra.mxu0 %v499
    %517 = vmatpush.msra.mxu0 %v484
    %518 = vmatpush.msra.mxu0 %v482
    %519 = vmatpush.msra.mxu0 %v480
    %520 = vmatmul.f32.gmra.mxu0 %v492
    %v521 = vpop.f32.mrf.mxu0
    %v522 = vadd.f32 0.0, %v521
    %523 = vmatmul.f32.gmra.mxu0 %v495
    %v524 = vpop.f32.mrf.mxu0
    %v525 = vadd.f32 0.0, %v524
    %526 = vdwg.mxu0
    %527 = vmatpush.msra.mxu0 0.0
    %528 = vmatpush.msra.mxu0 0.0
    %529 = vmatpush.msra.mxu0 0.0
    %530 = vmatpush.msra.mxu0 0.0
    %531 = vmatpush.msra.mxu0 0.0
    %532 = vmatpush.msra.mxu0 0.0
    %533 = vmatpush.msra.mxu0 0.0
    %534 = vmatpush.msra.mxu0 0.0
    %535 = vmatpush.msra.mxu0 0.0
    %536 = vmatpush.msra.mxu0 0.0
    %537 = vmatpush.msra.mxu0 0.0
    %538 = vmatpush.msra.mxu0 0.0
    %539 = vmatpush.msra.mxu0 %v502
    %540 = vmatpush.msra.mxu0 %v485
    %541 = vmatpush.msra.mxu0 %v483
    %542 = vmatpush.msra.mxu0 %v481
    %543 = vmatmul.f32.gmra.mxu0 %v492
    %v544 = vpop.f32.mrf.mxu0
    %v545 = vadd.f32 0.0, %v544
    %546 = vmatmul.f32.gmra.mxu0 %v495
    %v547 = vpop.f32.mrf.mxu0
    %v548 = vadd.f32 0.0, %v547
    %549 = vdwg.mxu0
    %v550 = vld [vmem:[%s4] sm:$0xff]
    %v551 = vld [vmem:[%s4 + $0x8] sm:$0xff]
    %v552 = vld [vmem:[%s4 + $0x10] sm:$0xff]
    %v553 = vld [vmem:[%s4 + $0x18] sm:$0xff]
    %v554 = vld [vmem:[%s4 + $0x20] sm:$0xff]
    %v555 = vld [vmem:[%s4 + $0x28] sm:$0xff]
    %v556 = vld [vmem:[%s4 + $0x30] sm:$0xff]
    %v557 = vld [vmem:[%s4 + $0x38] sm:$0xff]
    %v558 = vld [vmem:[%s4 + $0x40] sm:$0xff]
    %v559 = vld [vmem:[%s4 + $0x48] sm:$0xff]
    %v560 = vld [vmem:[%s4 + $0x50] sm:$0xff]
    %v561 = vld [vmem:[%s4 + $0x58] sm:$0xff]
    %v562 = vld [vmem:[%s4 + $0x60] sm:$0xff]
    %v563 = vld [vmem:[%s4 + $0x68] sm:$0xff]
    %v564 = vld [vmem:[%s4 + $0x70] sm:$0xff]
    %v565 = vld [vmem:[%s4 + $0x78] sm:$0xff]
    %v566 = vld [vmem:[%s4 + $0x80] sm:$0xff]
    %v567 = vld [vmem:[%s4 + $0x88] sm:$0xff]
    %v568 = vld [vmem:[%s4 + $0x90] sm:$0xff]
    %v569 = vld [vmem:[%s4 + $0x98] sm:$0xff]
    %v570 = vld [vmem:[%s4 + $0xa0] sm:$0xff]
    %vm571 = vcmask 326656
    %v573 = vsel %vm571, %v545, 0
    %v576 = vsel %vm571, %v548, 0
    %578 = vmatpush.msra.mxu0 %v565
    %579 = vmatpush.msra.mxu0 %v564
    %580 = vmatpush.msra.mxu0 %v563
    %581 = vmatpush.msra.mxu0 %v562
    %582 = vmatpush.msra.mxu0 %v561
    %583 = vmatpush.msra.mxu0 %v560
    %584 = vmatpush.msra.mxu0 %v559
    %585 = vmatpush.msra.mxu0 %v558
    %586 = vmatpush.msra.mxu0 %v557
    %587 = vmatpush.msra.mxu0 %v556
    %588 = vmatpush.msra.mxu0 %v555
    %589 = vmatpush.msra.mxu0 %v554
    %590 = vmatpush.msra.mxu0 %v553
    %591 = vmatpush.msra.mxu0 %v552
    %592 = vmatpush.msra.mxu0 %v551
    %593 = vmatpush.msra.mxu0 %v550
    %594 = vmatmul.f32.gmra.mxu0 %v522
    %v595 = vpop.f32.mrf.mxu0
    %v596 = vadd.f32 0.0, %v595
    %597 = vmatmul.f32.gmra.mxu0 %v525
    %v598 = vpop.f32.mrf.mxu0
    %v599 = vadd.f32 0.0, %v598
    %600 = vdwg.mxu0
    %601 = vmatpush.msra.mxu0 0.0
    %602 = vmatpush.msra.mxu0 0.0
    %603 = vmatpush.msra.mxu0 0.0
    %604 = vmatpush.msra.mxu0 0.0
    %605 = vmatpush.msra.mxu0 0.0
    %606 = vmatpush.msra.mxu0 0.0
    %607 = vmatpush.msra.mxu0 0.0
    %608 = vmatpush.msra.mxu0 0.0
    %609 = vmatpush.msra.mxu0 0.0
    %610 = vmatpush.msra.mxu0 0.0
    %611 = vmatpush.msra.mxu0 0.0
    %612 = vmatpush.msra.mxu0 %v570
    %613 = vmatpush.msra.mxu0 %v569
    %614 = vmatpush.msra.mxu0 %v568
    %615 = vmatpush.msra.mxu0 %v567
    %616 = vmatpush.msra.mxu0 %v566
    %617 = vmatmul.f32.gmra.mxu0 %v573
    %v618 = vpop.f32.mrf.mxu0
    %v619 = vadd.f32 %v596, %v618
    %620 = vmatmul.f32.gmra.mxu0 %v576
    %v621 = vpop.f32.mrf.mxu0
    %v622 = vadd.f32 %v599, %v621
    %623 = vdwg.mxu0
    %v624 = vpack.c.bf16 %v622, %v619
    %v625 = vld [vmem:[%s5] sm:$0xff]
    %v626 = vld [vmem:[%s5 + $0x8] sm:$0xff]
    %v627 = vld [vmem:[%s5 + $0x10] sm:$0xff]
    %v628 = vld [vmem:[%s5 + $0x18] sm:$0xff]
    %v629 = vld [vmem:[%s5 + $0x20] sm:$0xff]
    %v630 = vld [vmem:[%s5 + $0x28] sm:$0xff]
    %v631 = vld [vmem:[%s5 + $0x30] sm:$0xff]
    %v632 = vld [vmem:[%s5 + $0x38] sm:$0xff]
    %v633 = vld [vmem:[%s5 + $0x40] sm:$0xff]
    %v634 = vld [vmem:[%s5 + $0x48] sm:$0xff]
    %v635 = vld [vmem:[%s5 + $0x50] sm:$0x33]
    %v636 = vld [vmem:[%s6] sm:$0x3]
    %v638 = vperm.slane %v636, 0
    %v639 = vperm.slane %v636, 1
    %v653 = vunpack.c.l.b16 %v625
    %v654 = vunpack.c.h.b16 %v625
    %v655 = vunpack.c.l.b16 %v626
    %v656 = vunpack.c.h.b16 %v626
    %v657 = vunpack.c.l.b16 %v627
    %v658 = vunpack.c.h.b16 %v627
    %v659 = vunpack.c.l.b16 %v628
    %v660 = vunpack.c.h.b16 %v628
    %v661 = vunpack.c.l.b16 %v629
    %v662 = vunpack.c.h.b16 %v629
    %v663 = vunpack.c.l.b16 %v630
    %v664 = vunpack.c.h.b16 %v630
    %v665 = vunpack.c.l.b16 %v631
    %v666 = vunpack.c.h.b16 %v631
    %v667 = vunpack.c.l.b16 %v632
    %v668 = vunpack.c.h.b16 %v632
    %v669 = vunpack.c.l.b16 %v633
    %v670 = vunpack.c.h.b16 %v633
    %v671 = vunpack.c.l.b16 %v634
    %v672 = vunpack.c.h.b16 %v634
    %v673 = vunpack.c.l.b16 %v635
    %v674 = vunpack.c.h.b16 %v635
    %v675 = vpack.c.b16 %v655, %v653
    %v676 = vpack.c.b16 %v656, %v654
    %v677 = vpack.c.b16 %v659, %v657
    %v678 = vpack.c.b16 %v660, %v658
    %v679 = vpack.c.b16 %v663, %v661
    %v680 = vpack.c.b16 %v664, %v662
    %v681 = vpack.c.b16 %v667, %v665
    %v682 = vpack.c.b16 %v668, %v666
    %v683 = vpack.c.b16 %v671, %v669
    %v684 = vpack.c.b16 %v672, %v670
    %v685 = vpack.c.b16 %v673, %v673
    %v686 = vpack.c.b16 %v674, %v674
    %vm697 = vcmask 687104
    %v699 = vsel %vm697, %v624, 0
    %vm701 = vcmask 1041408
    %v703 = vsel %vm701, %v685, 0
    %v706 = vsel %vm701, %v686, 0
    %708 = vmatpush.bf16.msra.mxu0 0
    %709 = vmatpush.bf16.msra.mxu0 0
    %710 = vmatpush.bf16.msra.mxu0 %v703
    %711 = vmatpush.bf16.msra.mxu0 %v683
    %712 = vmatpush.bf16.msra.mxu0 %v681
    %713 = vmatpush.bf16.msra.mxu0 %v679
    %714 = vmatpush.bf16.msra.mxu0 %v677
    %715 = vmatpush.bf16.msra.mxu0 %v675
    %716 = vmatmul.bf16.gmra.mxu0 %v699
    %v717 = vpop.f32.mrf.mxu0
    %v718 = vadd.f32 %v638, %v717
    %v719 = vpop.f32.mrf.mxu0
    %v720 = vadd.f32 %v638, %v719
    %721 = vdwg.mxu0
    %722 = vmatpush.bf16.msra.mxu0 0
    %723 = vmatpush.bf16.msra.mxu0 0
    %724 = vmatpush.bf16.msra.mxu0 %v706
    %725 = vmatpush.bf16.msra.mxu0 %v684
    %726 = vmatpush.bf16.msra.mxu0 %v682
    %727 = vmatpush.bf16.msra.mxu0 %v680
    %728 = vmatpush.bf16.msra.mxu0 %v678
    %729 = vmatpush.bf16.msra.mxu0 %v676
    %730 = vmatmul.bf16.gmra.mxu0 %v699
    %v731 = vpop.f32.mrf.mxu0
    %v732 = vadd.f32 %v639, %v731
    %v733 = vpop.f32.mrf.mxu0
    %v734 = vadd.f32 %v639, %v733
    %735 = vdwg.mxu0
    %s736 = scalar_lea.vmem %s5, 88
    %v737 = vld [vmem:[%s736] sm:$0xff]
    %v738 = vld [vmem:[%s736 + $0x8] sm:$0xff]
    %v739 = vld [vmem:[%s736 + $0x10] sm:$0xff]
    %v740 = vld [vmem:[%s736 + $0x18] sm:$0xff]
    %v741 = vld [vmem:[%s736 + $0x20] sm:$0xff]
    %v742 = vld [vmem:[%s736 + $0x28] sm:$0xff]
    %v743 = vld [vmem:[%s736 + $0x30] sm:$0xff]
    %v744 = vld [vmem:[%s736 + $0x38] sm:$0xff]
    %v745 = vld [vmem:[%s736 + $0x40] sm:$0xff]
    %v746 = vld [vmem:[%s736 + $0x48] sm:$0xff]
    %v747 = vld [vmem:[%s736 + $0x50] sm:$0x33]
    %v748 = vshrl.u32 %v624, 16
    %v750 = vshll.u32 %v624, 16
    %v752 = vrot.slane %v750, 1
    %v753 = vor.u32 %v748, %v752
    %v765 = vunpack.c.l.b16 %v737
    %v766 = vunpack.c.h.b16 %v737
    %v767 = vunpack.c.l.b16 %v738
    %v768 = vunpack.c.h.b16 %v738
    %v769 = vunpack.c.l.b16 %v739
    %v770 = vunpack.c.h.b16 %v739
    %v771 = vunpack.c.l.b16 %v740
    %v772 = vunpack.c.h.b16 %v740
    %v773 = vunpack.c.l.b16 %v741
    %v774 = vunpack.c.h.b16 %v741
    %v775 = vunpack.c.l.b16 %v742
    %v776 = vunpack.c.h.b16 %v742
    %v777 = vunpack.c.l.b16 %v743
    %v778 = vunpack.c.h.b16 %v743
    %v779 = vunpack.c.l.b16 %v744
    %v780 = vunpack.c.h.b16 %v744
    %v781 = vunpack.c.l.b16 %v745
    %v782 = vunpack.c.h.b16 %v745
    %v783 = vunpack.c.l.b16 %v746
    %v784 = vunpack.c.h.b16 %v746
    %v785 = vunpack.c.l.b16 %v747
    %v786 = vunpack.c.h.b16 %v747
    %v787 = vpack.c.b16 %v767, %v765
    %v788 = vpack.c.b16 %v768, %v766
    %v789 = vpack.c.b16 %v771, %v769
    %v790 = vpack.c.b16 %v772, %v770
    %v791 = vpack.c.b16 %v775, %v773
    %v792 = vpack.c.b16 %v776, %v774
    %v793 = vpack.c.b16 %v779, %v777
    %v794 = vpack.c.b16 %v780, %v778
    %v795 = vpack.c.b16 %v783, %v781
    %v796 = vpack.c.b16 %v784, %v782
    %v797 = vpack.c.b16 %v785, %v785
    %v798 = vpack.c.b16 %v786, %v786
    %v810 = vsel %vm697, %v753, 0
    %v813 = vsel %vm701, %v797, 0
    %v816 = vsel %vm701, %v798, 0
    %818 = vmatpush.bf16.msra.mxu0 0
    %819 = vmatpush.bf16.msra.mxu0 0
    %820 = vmatpush.bf16.msra.mxu0 %v813
    %821 = vmatpush.bf16.msra.mxu0 %v795
    %822 = vmatpush.bf16.msra.mxu0 %v793
    %823 = vmatpush.bf16.msra.mxu0 %v791
    %824 = vmatpush.bf16.msra.mxu0 %v789
    %825 = vmatpush.bf16.msra.mxu0 %v787
    %826 = vmatmul.bf16.gmra.mxu0 %v810
    %v827 = vpop.f32.mrf.mxu0
    %v828 = vadd.f32 0.0, %v827
    %v829 = vpop.f32.mrf.mxu0
    %v830 = vadd.f32 0.0, %v829
    %831 = vdwg.mxu0
    %832 = vmatpush.bf16.msra.mxu0 0
    %833 = vmatpush.bf16.msra.mxu0 0
    %834 = vmatpush.bf16.msra.mxu0 %v816
    %835 = vmatpush.bf16.msra.mxu0 %v796
    %836 = vmatpush.bf16.msra.mxu0 %v794
    %837 = vmatpush.bf16.msra.mxu0 %v792
    %838 = vmatpush.bf16.msra.mxu0 %v790
    %839 = vmatpush.bf16.msra.mxu0 %v788
    %840 = vmatmul.bf16.gmra.mxu0 %v810
    %v841 = vpop.f32.mrf.mxu0
    %v842 = vadd.f32 0.0, %v841
    %v843 = vpop.f32.mrf.mxu0
    %v844 = vadd.f32 0.0, %v843
    %845 = vdwg.mxu0
    %v846 = vadd.f32 %v718, %v828
    %v847 = vadd.f32 %v732, %v842
    %v848 = vadd.f32 %v720, %v830
    %v849 = vadd.f32 %v734, %v844
    %s850 = scalar_lea.vmem %s5, 176
    %v851 = vld [vmem:[%s850] sm:$0xff]
    %v852 = vld [vmem:[%s850 + $0x8] sm:$0xff]
    %v853 = vld [vmem:[%s850 + $0x10] sm:$0xff]
    %v854 = vld [vmem:[%s850 + $0x18] sm:$0xff]
    %v855 = vld [vmem:[%s850 + $0x20] sm:$0xff]
    %v856 = vld [vmem:[%s850 + $0x28] sm:$0xff]
    %v857 = vld [vmem:[%s850 + $0x30] sm:$0xff]
    %v858 = vld [vmem:[%s850 + $0x38] sm:$0xff]
    %v859 = vld [vmem:[%s850 + $0x40] sm:$0xff]
    %v860 = vld [vmem:[%s850 + $0x48] sm:$0xff]
    %v861 = vld [vmem:[%s850 + $0x50] sm:$0x33]
    %v863 = vrot.slane %v624, 1
    %v875 = vunpack.c.l.b16 %v851
    %v876 = vunpack.c.h.b16 %v851
    %v877 = vunpack.c.l.b16 %v852
    %v878 = vunpack.c.h.b16 %v852
    %v879 = vunpack.c.l.b16 %v853
    %v880 = vunpack.c.h.b16 %v853
    %v881 = vunpack.c.l.b16 %v854
    %v882 = vunpack.c.h.b16 %v854
    %v883 = vunpack.c.l.b16 %v855
    %v884 = vunpack.c.h.b16 %v855
    %v885 = vunpack.c.l.b16 %v856
    %v886 = vunpack.c.h.b16 %v856
    %v887 = vunpack.c.l.b16 %v857
    %v888 = vunpack.c.h.b16 %v857
    %v889 = vunpack.c.l.b16 %v858
    %v890 = vunpack.c.h.b16 %v858
    %v891 = vunpack.c.l.b16 %v859
    %v892 = vunpack.c.h.b16 %v859
    %v893 = vunpack.c.l.b16 %v860
    %v894 = vunpack.c.h.b16 %v860
    %v895 = vunpack.c.l.b16 %v861
    %v896 = vunpack.c.h.b16 %v861
    %v897 = vpack.c.b16 %v877, %v875
    %v898 = vpack.c.b16 %v878, %v876
    %v899 = vpack.c.b16 %v881, %v879
    %v900 = vpack.c.b16 %v882, %v880
    %v901 = vpack.c.b16 %v885, %v883
    %v902 = vpack.c.b16 %v886, %v884
    %v903 = vpack.c.b16 %v889, %v887
    %v904 = vpack.c.b16 %v890, %v888
    %v905 = vpack.c.b16 %v893, %v891
    %v906 = vpack.c.b16 %v894, %v892
    %v907 = vpack.c.b16 %v895, %v895
    %v908 = vpack.c.b16 %v896, %v896
    %v920 = vsel %vm697, %v863, 0
    %v923 = vsel %vm701, %v907, 0
    %v926 = vsel %vm701, %v908, 0
    %928 = vmatpush.bf16.msra.mxu0 0
    %929 = vmatpush.bf16.msra.mxu0 0
    %930 = vmatpush.bf16.msra.mxu0 %v923
    %931 = vmatpush.bf16.msra.mxu0 %v905
    %932 = vmatpush.bf16.msra.mxu0 %v903
    %933 = vmatpush.bf16.msra.mxu0 %v901
    %934 = vmatpush.bf16.msra.mxu0 %v899
    %935 = vmatpush.bf16.msra.mxu0 %v897
    %936 = vmatmul.bf16.gmra.mxu0 %v920
    %v937 = vpop.f32.mrf.mxu0
    %v938 = vadd.f32 0.0, %v937
    %v939 = vpop.f32.mrf.mxu0
    %v940 = vadd.f32 0.0, %v939
    %941 = vdwg.mxu0
    %942 = vmatpush.bf16.msra.mxu0 0
    %943 = vmatpush.bf16.msra.mxu0 0
    %944 = vmatpush.bf16.msra.mxu0 %v926
    %945 = vmatpush.bf16.msra.mxu0 %v906
    %946 = vmatpush.bf16.msra.mxu0 %v904
    %947 = vmatpush.bf16.msra.mxu0 %v902
    %948 = vmatpush.bf16.msra.mxu0 %v900
    %949 = vmatpush.bf16.msra.mxu0 %v898
    %950 = vmatmul.bf16.gmra.mxu0 %v920
    %v951 = vpop.f32.mrf.mxu0
    %v952 = vadd.f32 0.0, %v951
    %v953 = vpop.f32.mrf.mxu0
    %v954 = vadd.f32 0.0, %v953
    %955 = vdwg.mxu0
    %v956 = vadd.f32 %v846, %v938
    %v957 = vadd.f32 %v847, %v952
    %v958 = vadd.f32 %v848, %v940
    %v959 = vadd.f32 %v849, %v954
    %s960 = scalar_lea.vmem %s5, 264
    %v961 = vld [vmem:[%s960] sm:$0xff]
    %v962 = vld [vmem:[%s960 + $0x8] sm:$0xff]
    %v963 = vld [vmem:[%s960 + $0x10] sm:$0xff]
    %v964 = vld [vmem:[%s960 + $0x18] sm:$0xff]
    %v965 = vld [vmem:[%s960 + $0x20] sm:$0xff]
    %v966 = vld [vmem:[%s960 + $0x28] sm:$0xff]
    %v967 = vld [vmem:[%s960 + $0x30] sm:$0xff]
    %v968 = vld [vmem:[%s960 + $0x38] sm:$0xff]
    %v969 = vld [vmem:[%s960 + $0x40] sm:$0xff]
    %v970 = vld [vmem:[%s960 + $0x48] sm:$0xff]
    %v971 = vld [vmem:[%s960 + $0x50] sm:$0x33]
    %v972 = vrot.slane %v748, 1
    %v973 = vrot.slane %v750, 2
    %v974 = vor.u32 %v972, %v973
    %v986 = vunpack.c.l.b16 %v961
    %v987 = vunpack.c.h.b16 %v961
    %v988 = vunpack.c.l.b16 %v962
    %v989 = vunpack.c.h.b16 %v962
    %v990 = vunpack.c.l.b16 %v963
    %v991 = vunpack.c.h.b16 %v963
    %v992 = vunpack.c.l.b16 %v964
    %v993 = vunpack.c.h.b16 %v964
    %v994 = vunpack.c.l.b16 %v965
    %v995 = vunpack.c.h.b16 %v965
    %v996 = vunpack.c.l.b16 %v966
    %v997 = vunpack.c.h.b16 %v966
    %v998 = vunpack.c.l.b16 %v967
    %v999 = vunpack.c.h.b16 %v967
    %v1000 = vunpack.c.l.b16 %v968
    %v1001 = vunpack.c.h.b16 %v968
    %v1002 = vunpack.c.l.b16 %v969
    %v1003 = vunpack.c.h.b16 %v969
    %v1004 = vunpack.c.l.b16 %v970
    %v1005 = vunpack.c.h.b16 %v970
    %v1006 = vunpack.c.l.b16 %v971
    %v1007 = vunpack.c.h.b16 %v971
    %v1008 = vpack.c.b16 %v988, %v986
    %v1009 = vpack.c.b16 %v989, %v987
    %v1010 = vpack.c.b16 %v992, %v990
    %v1011 = vpack.c.b16 %v993, %v991
    %v1012 = vpack.c.b16 %v996, %v994
    %v1013 = vpack.c.b16 %v997, %v995
    %v1014 = vpack.c.b16 %v1000, %v998
    %v1015 = vpack.c.b16 %v1001, %v999
    %v1016 = vpack.c.b16 %v1004, %v1002
    %v1017 = vpack.c.b16 %v1005, %v1003
    %v1018 = vpack.c.b16 %v1006, %v1006
    %v1019 = vpack.c.b16 %v1007, %v1007
    %v1031 = vsel %vm697, %v974, 0
    %v1034 = vsel %vm701, %v1018, 0
    %v1037 = vsel %vm701, %v1019, 0
    %1039 = vmatpush.bf16.msra.mxu0 0
    %1040 = vmatpush.bf16.msra.mxu0 0
    %1041 = vmatpush.bf16.msra.mxu0 %v1034
    %1042 = vmatpush.bf16.msra.mxu0 %v1016
    %1043 = vmatpush.bf16.msra.mxu0 %v1014
    %1044 = vmatpush.bf16.msra.mxu0 %v1012
    %1045 = vmatpush.bf16.msra.mxu0 %v1010
    %1046 = vmatpush.bf16.msra.mxu0 %v1008
    %1047 = vmatmul.bf16.gmra.mxu0 %v1031
    %v1048 = vpop.f32.mrf.mxu0
    %v1049 = vadd.f32 0.0, %v1048
    %v1050 = vpop.f32.mrf.mxu0
    %v1051 = vadd.f32 0.0, %v1050
    %1052 = vdwg.mxu0
    %1053 = vmatpush.bf16.msra.mxu0 0
    %1054 = vmatpush.bf16.msra.mxu0 0
    %1055 = vmatpush.bf16.msra.mxu0 %v1037
    %1056 = vmatpush.bf16.msra.mxu0 %v1017
    %1057 = vmatpush.bf16.msra.mxu0 %v1015
    %1058 = vmatpush.bf16.msra.mxu0 %v1013
    %1059 = vmatpush.bf16.msra.mxu0 %v1011
    %1060 = vmatpush.bf16.msra.mxu0 %v1009
    %1061 = vmatmul.bf16.gmra.mxu0 %v1031
    %v1062 = vpop.f32.mrf.mxu0
    %v1063 = vadd.f32 0.0, %v1062
    %v1064 = vpop.f32.mrf.mxu0
    %v1065 = vadd.f32 0.0, %v1064
    %1066 = vdwg.mxu0
    %v1067 = vadd.f32 %v956, %v1049
    %v1068 = vadd.f32 %v957, %v1063
    %v1069 = vadd.f32 %v958, %v1051
    %v1070 = vadd.f32 %v959, %v1065
    %s1071 = scalar_lea.vmem %s5, 352
    %v1072 = vld [vmem:[%s1071] sm:$0xff]
    %v1073 = vld [vmem:[%s1071 + $0x8] sm:$0xff]
    %v1074 = vld [vmem:[%s1071 + $0x10] sm:$0xff]
    %v1075 = vld [vmem:[%s1071 + $0x18] sm:$0xff]
    %v1076 = vld [vmem:[%s1071 + $0x20] sm:$0xff]
    %v1077 = vld [vmem:[%s1071 + $0x28] sm:$0xff]
    %v1078 = vld [vmem:[%s1071 + $0x30] sm:$0xff]
    %v1079 = vld [vmem:[%s1071 + $0x38] sm:$0xff]
    %v1080 = vld [vmem:[%s1071 + $0x40] sm:$0xff]
    %v1081 = vld [vmem:[%s1071 + $0x48] sm:$0xff]
    %v1082 = vld [vmem:[%s1071 + $0x50] sm:$0x33]
    %v1083 = vrot.slane %v624, 2
    %v1095 = vunpack.c.l.b16 %v1072
    %v1096 = vunpack.c.h.b16 %v1072
    %v1097 = vunpack.c.l.b16 %v1073
    %v1098 = vunpack.c.h.b16 %v1073
    %v1099 = vunpack.c.l.b16 %v1074
    %v1100 = vunpack.c.h.b16 %v1074
    %v1101 = vunpack.c.l.b16 %v1075
    %v1102 = vunpack.c.h.b16 %v1075
    %v1103 = vunpack.c.l.b16 %v1076
    %v1104 = vunpack.c.h.b16 %v1076
    %v1105 = vunpack.c.l.b16 %v1077
    %v1106 = vunpack.c.h.b16 %v1077
    %v1107 = vunpack.c.l.b16 %v1078
    %v1108 = vunpack.c.h.b16 %v1078
    %v1109 = vunpack.c.l.b16 %v1079
    %v1110 = vunpack.c.h.b16 %v1079
    %v1111 = vunpack.c.l.b16 %v1080
    %v1112 = vunpack.c.h.b16 %v1080
    %v1113 = vunpack.c.l.b16 %v1081
    %v1114 = vunpack.c.h.b16 %v1081
    %v1115 = vunpack.c.l.b16 %v1082
    %v1116 = vunpack.c.h.b16 %v1082
    %v1117 = vpack.c.b16 %v1097, %v1095
    %v1118 = vpack.c.b16 %v1098, %v1096
    %v1119 = vpack.c.b16 %v1101, %v1099
    %v1120 = vpack.c.b16 %v1102, %v1100
    %v1121 = vpack.c.b16 %v1105, %v1103
    %v1122 = vpack.c.b16 %v1106, %v1104
    %v1123 = vpack.c.b16 %v1109, %v1107
    %v1124 = vpack.c.b16 %v1110, %v1108
    %v1125 = vpack.c.b16 %v1113, %v1111
    %v1126 = vpack.c.b16 %v1114, %v1112
    %v1127 = vpack.c.b16 %v1115, %v1115
    %v1128 = vpack.c.b16 %v1116, %v1116
    %v1140 = vsel %vm697, %v1083, 0
    %v1143 = vsel %vm701, %v1127, 0
    %v1146 = vsel %vm701, %v1128, 0
    %1148 = vmatpush.bf16.msra.mxu0 0
    %1149 = vmatpush.bf16.msra.mxu0 0
    %1150 = vmatpush.bf16.msra.mxu0 %v1143
    %1151 = vmatpush.bf16.msra.mxu0 %v1125
    %1152 = vmatpush.bf16.msra.mxu0 %v1123
    %1153 = vmatpush.bf16.msra.mxu0 %v1121
    %1154 = vmatpush.bf16.msra.mxu0 %v1119
    %1155 = vmatpush.bf16.msra.mxu0 %v1117
    %1156 = vmatmul.bf16.gmra.mxu0 %v1140
    %v1157 = vpop.f32.mrf.mxu0
    %v1158 = vadd.f32 0.0, %v1157
    %v1159 = vpop.f32.mrf.mxu0
    %v1160 = vadd.f32 0.0, %v1159
    %1161 = vdwg.mxu0
    %1162 = vmatpush.bf16.msra.mxu0 0
    %1163 = vmatpush.bf16.msra.mxu0 0
    %1164 = vmatpush.bf16.msra.mxu0 %v1146
    %1165 = vmatpush.bf16.msra.mxu0 %v1126
    %1166 = vmatpush.bf16.msra.mxu0 %v1124
    %1167 = vmatpush.bf16.msra.mxu0 %v1122
    %1168 = vmatpush.bf16.msra.mxu0 %v1120
    %1169 = vmatpush.bf16.msra.mxu0 %v1118
    %1170 = vmatmul.bf16.gmra.mxu0 %v1140
    %v1171 = vpop.f32.mrf.mxu0
    %v1172 = vadd.f32 0.0, %v1171
    %v1173 = vpop.f32.mrf.mxu0
    %v1174 = vadd.f32 0.0, %v1173
    %1175 = vdwg.mxu0
    %v1176 = vadd.f32 %v1067, %v1158
    %v1177 = vadd.f32 %v1068, %v1172
    %v1178 = vadd.f32 %v1069, %v1160
    %v1179 = vadd.f32 %v1070, %v1174
    %v1180 = vmax.f32 %v1176, 0.0
    %v1181 = vmax.f32 %v1177, 0.0
    %v1182 = vmax.f32 %v1178, 0.0
    %v1183 = vmax.f32 %v1179, 0.0
    %v1184 = vld [vmem:[%s7] sm:$0x1f]
    %vm1185 = vcmask 80896
    %v1187 = vsel %vm1185, %v1184, 0
    %v1190 = vsel %vm701, %v1182, 0
    %v1193 = vsel %vm701, %v1183, 0
    %1195 = vmatpush.msra.mxu0 0.0
    %1196 = vmatpush.msra.mxu0 0.0
    %1197 = vmatpush.msra.mxu0 0.0
    %1198 = vmatpush.msra.mxu0 0.0
    %1199 = vmatpush.msra.mxu0 0.0
    %1200 = vmatpush.msra.mxu0 0.0
    %1201 = vmatpush.msra.mxu0 0.0
    %1202 = vmatpush.msra.mxu0 0.0
    %1203 = vmatpush.msra.mxu0 0.0
    %1204 = vmatpush.msra.mxu0 0.0
    %1205 = vmatpush.msra.mxu0 0.0
    %1206 = vmatpush.msra.mxu0 0.0
    %1207 = vmatpush.msra.mxu0 0.0
    %1208 = vmatpush.msra.mxu0 0.0
    %1209 = vmatpush.msra.mxu0 %v1190
    %1210 = vmatpush.msra.mxu0 %v1180
    %1211 = vmatmul.f32.gmra.mxu0 %v1187
    %v1212 = vpop.f32.mrf.mxu0
    %v1213 = vadd.f32 0.0, %v1212
    %1214 = vdwg.mxu0
    %1215 = vmatpush.msra.mxu0 0.0
    %1216 = vmatpush.msra.mxu0 0.0
    %1217 = vmatpush.msra.mxu0 0.0
    %1218 = vmatpush.msra.mxu0 0.0
    %1219 = vmatpush.msra.mxu0 0.0
    %1220 = vmatpush.msra.mxu0 0.0
    %1221 = vmatpush.msra.mxu0 0.0
    %1222 = vmatpush.msra.mxu0 0.0
    %1223 = vmatpush.msra.mxu0 0.0
    %1224 = vmatpush.msra.mxu0 0.0
    %1225 = vmatpush.msra.mxu0 0.0
    %1226 = vmatpush.msra.mxu0 0.0
    %1227 = vmatpush.msra.mxu0 0.0
    %1228 = vmatpush.msra.mxu0 0.0
    %1229 = vmatpush.msra.mxu0 %v1193
    %1230 = vmatpush.msra.mxu0 %v1181
    %1231 = vmatmul.f32.gmra.mxu0 %v1187
    %v1232 = vpop.f32.mrf.mxu0
    %v1233 = vadd.f32 0.0, %v1232
    %1234 = vdwg.mxu0
    %v1235 = vld [vmem:[%s8] sm:$0xff]
    %v1236 = vld [vmem:[%s8 + $0x8] sm:$0xff]
    %v1237 = vld [vmem:[%s8 + $0x10] sm:$0xff]
    %v1238 = vld [vmem:[%s8 + $0x18] sm:$0xff]
    %v1239 = vld [vmem:[%s8 + $0x20] sm:$0xff]
    %v1240 = vld [vmem:[%s8 + $0x28] sm:$0xff]
    %v1241 = vld [vmem:[%s8 + $0x30] sm:$0xff]
    %v1242 = vld [vmem:[%s8 + $0x38] sm:$0xff]
    %v1243 = vld [vmem:[%s8 + $0x40] sm:$0xff]
    %v1244 = vld [vmem:[%s8 + $0x48] sm:$0xff]
    %v1245 = vld [vmem:[%s8 + $0x50] sm:$0xff]
    %v1246 = vld [vmem:[%s8 + $0x58] sm:$0xff]
    %v1247 = vld [vmem:[%s8 + $0x60] sm:$0xff]
    %v1248 = vld [vmem:[%s8 + $0x68] sm:$0xff]
    %v1249 = vld [vmem:[%s8 + $0x70] sm:$0xff]
    %v1250 = vld [vmem:[%s8 + $0x78] sm:$0xff]
    %v1251 = vld [vmem:[%s8 + $0x80] sm:$0xff]
    %v1252 = vld [vmem:[%s8 + $0x88] sm:$0xff]
    %v1253 = vld [vmem:[%s8 + $0x90] sm:$0xff]
    %v1254 = vld [vmem:[%s8 + $0x98] sm:$0xff]
    %v1256 = vsel %vm95, %v1233, 0
    %1258 = vmatpush.msra.mxu0 %v1250
    %1259 = vmatpush.msra.mxu0 %v1249
    %1260 = vmatpush.msra.mxu0 %v1248
    %1261 = vmatpush.msra.mxu0 %v1247
    %1262 = vmatpush.msra.mxu0 %v1246
    %1263 = vmatpush.msra.mxu0 %v1245
    %1264 = vmatpush.msra.mxu0 %v1244
    %1265 = vmatpush.msra.mxu0 %v1243
    %1266 = vmatpush.msra.mxu0 %v1242
    %1267 = vmatpush.msra.mxu0 %v1241
    %1268 = vmatpush.msra.mxu0 %v1240
    %1269 = vmatpush.msra.mxu0 %v1239
    %1270 = vmatpush.msra.mxu0 %v1238
    %1271 = vmatpush.msra.mxu0 %v1237
    %1272 = vmatpush.msra.mxu0 %v1236
    %1273 = vmatpush.msra.mxu0 %v1235
    %1274 = vmatmul.f32.gmra.mxu0 %v1213
    %v1275 = vpop.f32.mrf.mxu0
    %v1276 = vadd.f32 0.0, %v1275
    %1277 = vdwg.mxu0
    %1278 = vmatpush.msra.mxu0 0.0
    %1279 = vmatpush.msra.mxu0 0.0
    %1280 = vmatpush.msra.mxu0 0.0
    %1281 = vmatpush.msra.mxu0 0.0
    %1282 = vmatpush.msra.mxu0 0.0
    %1283 = vmatpush.msra.mxu0 0.0
    %1284 = vmatpush.msra.mxu0 0.0
    %1285 = vmatpush.msra.mxu0 0.0
    %1286 = vmatpush.msra.mxu0 0.0
    %1287 = vmatpush.msra.mxu0 0.0
    %1288 = vmatpush.msra.mxu0 0.0
    %1289 = vmatpush.msra.mxu0 0.0
    %1290 = vmatpush.msra.mxu0 %v1254
    %1291 = vmatpush.msra.mxu0 %v1253
    %1292 = vmatpush.msra.mxu0 %v1252
    %1293 = vmatpush.msra.mxu0 %v1251
    %1294 = vmatmul.f32.gmra.mxu0 %v1256
    %v1295 = vpop.f32.mrf.mxu0
    %v1296 = vadd.f32 %v1276, %v1295
    %1297 = vdwg.mxu0
    %s1298 = smul.u32 %s52, 8
    %s1299 = scalar_lea.vmem [#allocation2], %s1298
    %vm1300 = vcmask 651264
    %1301 = vst.msk [vmem:[%s1299] sm:$0x1f] %vm1300, %v1296
  $region66: #{my_model_forward.1} parent=0 // loop_footer
    %s56 = sadd.s32 1, %s52
  $region67: #{my_model_forward.1} parent=0 // loop_footer_branch
    %51 = sbr.rel target = $region63
  $region68: #{my_model_forward.1} parent=0 // loop_exit
    _
  %v1302 = vld [vmem:[#allocation2] sm:$0x1f]
  %v1303 = vld [vmem:[#allocation2 + $0x8] sm:$0x1f]
  %v1304 = vld [vmem:[#allocation2 + $0x10] sm:$0x1f]
  %v1305 = vld [vmem:[#allocation2 + $0x18] sm:$0x1f]
  %v1306 = vld [vmem:[#allocation2 + $0x20] sm:$0x1f]
  %v1307 = vld [vmem:[#allocation2 + $0x28] sm:$0x1f]
  %v1308 = vld [vmem:[#allocation2 + $0x30] sm:$0x1f]
  %v1309 = vld [vmem:[#allocation2 + $0x38] sm:$0x1f]
  %v1310 = vpack.c.bf16 %v1302, %v1302
  %v1311 = vpack.c.bf16 %v1303, %v1303
  %v1312 = vpack.c.bf16 %v1304, %v1304
  %v1313 = vpack.c.bf16 %v1305, %v1305
  %v1314 = vpack.c.bf16 %v1306, %v1306
  %v1315 = vpack.c.bf16 %v1307, %v1307
  %v1316 = vpack.c.bf16 %v1308, %v1308
  %v1317 = vpack.c.bf16 %v1309, %v1309
  %v1318 = vld [vmem:[%s9] sm:$0xf]
  %v1319 = vld [vmem:[%s9 + $0x4] sm:$0xf]
  %v1320 = vld [vmem:[%s9 + $0x8] sm:$0xf]
  %v1321 = vld [vmem:[%s9 + $0xc] sm:$0xf]
  %v1322 = vld [vmem:[%s9 + $0x10] sm:$0xf]
  %v1323 = vld [vmem:[%s9 + $0x14] sm:$0xf]
  %v1324 = vld [vmem:[%s9 + $0x18] sm:$0xf]
  %v1325 = vld [vmem:[%s9 + $0x1c] sm:$0xf]
  %v1326 = vld [vmem:[%s9 + $0x20] sm:$0xf]
  %v1327 = vld [vmem:[%s9 + $0x24] sm:$0xf]
  %v1328 = vld [vmem:[%s10] sm:$0x1]
  %v1330 = vperm.slane %v1328, 0
  %v1340 = vunpack.c.l.b16 %v1310
  %v1341 = vunpack.c.l.b16 %v1311
  %v1342 = vunpack.c.l.b16 %v1312
  %v1343 = vunpack.c.l.b16 %v1313
  %v1344 = vunpack.c.l.b16 %v1314
  %v1345 = vunpack.c.l.b16 %v1315
  %v1346 = vunpack.c.l.b16 %v1316
  %v1347 = vunpack.c.l.b16 %v1317
  %v1348 = vrot.slane %v1341, 7
  %vm1349 = vcmask 1041409
  %v1350 = vsel %vm1349, %v1348, %v1340
  %v1351 = vrot.slane %v1342, 6
  %vm1352 = vcmask 1042434
  %v1353 = vsel %vm1352, %v1351, %v1350
  %v1354 = vrot.slane %v1343, 5
  %vm1355 = vcmask 1043459
  %v1356 = vsel %vm1355, %v1354, %v1353
  %v1357 = vrot.slane %v1344, 4
  %vm1358 = vcmask 1044484
  %v1359 = vsel %vm1358, %v1357, %v1356
  %v1360 = vrot.slane %v1345, 3
  %vm1361 = vcmask 1045509
  %v1362 = vsel %vm1361, %v1360, %v1359
  %v1363 = vrot.slane %v1346, 2
  %vm1364 = vcmask 1046534
  %v1365 = vsel %vm1364, %v1363, %v1362
  %v1366 = vrot.slane %v1347, 1
  %vm1367 = vcmask 1047559
  %v1368 = vsel %vm1367, %v1366, %v1365
  %v1369 = vpack.c.b16 %v1368, %v1368
  %v1380 = vunpack.c.l.b16 %v1318
  %v1381 = vunpack.c.l.b16 %v1319
  %v1382 = vunpack.c.l.b16 %v1320
  %v1383 = vunpack.c.l.b16 %v1321
  %v1384 = vunpack.c.l.b16 %v1322
  %v1385 = vunpack.c.l.b16 %v1323
  %v1386 = vunpack.c.l.b16 %v1324
  %v1387 = vunpack.c.l.b16 %v1325
  %v1388 = vunpack.c.l.b16 %v1326
  %v1389 = vunpack.c.l.b16 %v1327
  %v1390 = vpack.c.b16 %v1381, %v1380
  %v1391 = vpack.c.b16 %v1383, %v1382
  %v1392 = vpack.c.b16 %v1385, %v1384
  %v1393 = vpack.c.b16 %v1387, %v1386
  %v1394 = vpack.c.b16 %v1389, %v1388
  %vm1400 = vcmask 654336
  %v1402 = vsel %vm1400, %v1369, 0
  %1404 = vmatpush.bf16.msra.mxu0 0
  %1405 = vmatpush.bf16.msra.mxu0 0
  %1406 = vmatpush.bf16.msra.mxu0 0
  %1407 = vmatpush.bf16.msra.mxu0 %v1394
  %1408 = vmatpush.bf16.msra.mxu0 %v1393
  %1409 = vmatpush.bf16.msra.mxu0 %v1392
  %1410 = vmatpush.bf16.msra.mxu0 %v1391
  %1411 = vmatpush.bf16.msra.mxu0 %v1390
  %1412 = vmatmul.bf16.gmra.mxu0 %v1402
  %v1413 = vpop.f32.mrf.mxu0
  %v1414 = vadd.f32 %v1330, %v1413
  %v1415 = vpop.f32.mrf.mxu0
  %1416 = vdwg.mxu0
  %s1417 = scalar_lea.vmem %s9, 40
  %v1418 = vld [vmem:[%s1417] sm:$0xf]
  %v1419 = vld [vmem:[%s1417 + $0x4] sm:$0xf]
  %v1420 = vld [vmem:[%s1417 + $0x8] sm:$0xf]
  %v1421 = vld [vmem:[%s1417 + $0xc] sm:$0xf]
  %v1422 = vld [vmem:[%s1417 + $0x10] sm:$0xf]
  %v1423 = vld [vmem:[%s1417 + $0x14] sm:$0xf]
  %v1424 = vld [vmem:[%s1417 + $0x18] sm:$0xf]
  %v1425 = vld [vmem:[%s1417 + $0x1c] sm:$0xf]
  %v1426 = vld [vmem:[%s1417 + $0x20] sm:$0xf]
  %v1427 = vld [vmem:[%s1417 + $0x24] sm:$0xf]
  %v1428 = vrot.slane %v1340, 1
  %v1429 = vsel %vm1349, %v1341, %v1428
  %v1430 = vrot.slane %v1342, 7
  %v1431 = vsel %vm1352, %v1430, %v1429
  %v1432 = vrot.slane %v1343, 6
  %v1433 = vsel %vm1355, %v1432, %v1431
  %v1434 = vrot.slane %v1344, 5
  %v1435 = vsel %vm1358, %v1434, %v1433
  %v1436 = vrot.slane %v1345, 4
  %v1437 = vsel %vm1361, %v1436, %v1435
  %v1438 = vrot.slane %v1346, 3
  %v1439 = vsel %vm1364, %v1438, %v1437
  %v1440 = vrot.slane %v1347, 2
  %v1441 = vsel %vm1367, %v1440, %v1439
  %v1442 = vpack.c.b16 %v1441, %v1441
  %v1453 = vunpack.c.l.b16 %v1418
  %v1454 = vunpack.c.l.b16 %v1419
  %v1455 = vunpack.c.l.b16 %v1420
  %v1456 = vunpack.c.l.b16 %v1421
  %v1457 = vunpack.c.l.b16 %v1422
  %v1458 = vunpack.c.l.b16 %v1423
  %v1459 = vunpack.c.l.b16 %v1424
  %v1460 = vunpack.c.l.b16 %v1425
  %v1461 = vunpack.c.l.b16 %v1426
  %v1462 = vunpack.c.l.b16 %v1427
  %v1463 = vpack.c.b16 %v1454, %v1453
  %v1464 = vpack.c.b16 %v1456, %v1455
  %v1465 = vpack.c.b16 %v1458, %v1457
  %v1466 = vpack.c.b16 %v1460, %v1459
  %v1467 = vpack.c.b16 %v1462, %v1461
  %v1474 = vsel %vm1400, %v1442, 0
  %1476 = vmatpush.bf16.msra.mxu0 0
  %1477 = vmatpush.bf16.msra.mxu0 0
  %1478 = vmatpush.bf16.msra.mxu0 0
  %1479 = vmatpush.bf16.msra.mxu0 %v1467
  %1480 = vmatpush.bf16.msra.mxu0 %v1466
  %1481 = vmatpush.bf16.msra.mxu0 %v1465
  %1482 = vmatpush.bf16.msra.mxu0 %v1464
  %1483 = vmatpush.bf16.msra.mxu0 %v1463
  %1484 = vmatmul.bf16.gmra.mxu0 %v1474
  %v1485 = vpop.f32.mrf.mxu0
  %v1486 = vadd.f32 0.0, %v1485
  %v1487 = vpop.f32.mrf.mxu0
  %1488 = vdwg.mxu0
  %v1489 = vadd.f32 %v1414, %v1486
  %s1490 = scalar_lea.vmem %s9, 80
  %v1491 = vld [vmem:[%s1490] sm:$0xf]
  %v1492 = vld [vmem:[%s1490 + $0x4] sm:$0xf]
  %v1493 = vld [vmem:[%s1490 + $0x8] sm:$0xf]
  %v1494 = vld [vmem:[%s1490 + $0xc] sm:$0xf]
  %v1495 = vld [vmem:[%s1490 + $0x10] sm:$0xf]
  %v1496 = vld [vmem:[%s1490 + $0x14] sm:$0xf]
  %v1497 = vld [vmem:[%s1490 + $0x18] sm:$0xf]
  %v1498 = vld [vmem:[%s1490 + $0x1c] sm:$0xf]
  %v1499 = vld [vmem:[%s1490 + $0x20] sm:$0xf]
  %v1500 = vld [vmem:[%s1490 + $0x24] sm:$0xf]
  %v1501 = vrot.slane %v1340, 2
  %v1502 = vrot.slane %v1341, 1
  %v1503 = vsel %vm1349, %v1502, %v1501
  %v1504 = vsel %vm1352, %v1342, %v1503
  %v1505 = vrot.slane %v1343, 7
  %v1506 = vsel %vm1355, %v1505, %v1504
  %v1507 = vrot.slane %v1344, 6
  %v1508 = vsel %vm1358, %v1507, %v1506
  %v1509 = vrot.slane %v1345, 5
  %v1510 = vsel %vm1361, %v1509, %v1508
  %v1511 = vrot.slane %v1346, 4
  %v1512 = vsel %vm1364, %v1511, %v1510
  %v1513 = vrot.slane %v1347, 3
  %v1514 = vsel %vm1367, %v1513, %v1512
  %v1515 = vpack.c.b16 %v1514, %v1514
  %v1526 = vunpack.c.l.b16 %v1491
  %v1527 = vunpack.c.l.b16 %v1492
  %v1528 = vunpack.c.l.b16 %v1493
  %v1529 = vunpack.c.l.b16 %v1494
  %v1530 = vunpack.c.l.b16 %v1495
  %v1531 = vunpack.c.l.b16 %v1496
  %v1532 = vunpack.c.l.b16 %v1497
  %v1533 = vunpack.c.l.b16 %v1498
  %v1534 = vunpack.c.l.b16 %v1499
  %v1535 = vunpack.c.l.b16 %v1500
  %v1536 = vpack.c.b16 %v1527, %v1526
  %v1537 = vpack.c.b16 %v1529, %v1528
  %v1538 = vpack.c.b16 %v1531, %v1530
  %v1539 = vpack.c.b16 %v1533, %v1532
  %v1540 = vpack.c.b16 %v1535, %v1534
  %v1547 = vsel %vm1400, %v1515, 0
  %1549 = vmatpush.bf16.msra.mxu0 0
  %1550 = vmatpush.bf16.msra.mxu0 0
  %1551 = vmatpush.bf16.msra.mxu0 0
  %1552 = vmatpush.bf16.msra.mxu0 %v1540
  %1553 = vmatpush.bf16.msra.mxu0 %v1539
  %1554 = vmatpush.bf16.msra.mxu0 %v1538
  %1555 = vmatpush.bf16.msra.mxu0 %v1537
  %1556 = vmatpush.bf16.msra.mxu0 %v1536
  %1557 = vmatmul.bf16.gmra.mxu0 %v1547
  %v1558 = vpop.f32.mrf.mxu0
  %v1559 = vadd.f32 0.0, %v1558
  %v1560 = vpop.f32.mrf.mxu0
  %1561 = vdwg.mxu0
  %v1562 = vadd.f32 %v1489, %v1559
  %s1563 = scalar_lea.vmem %s9, 120
  %v1564 = vld [vmem:[%s1563] sm:$0xf]
  %v1565 = vld [vmem:[%s1563 + $0x4] sm:$0xf]
  %v1566 = vld [vmem:[%s1563 + $0x8] sm:$0xf]
  %v1567 = vld [vmem:[%s1563 + $0xc] sm:$0xf]
  %v1568 = vld [vmem:[%s1563 + $0x10] sm:$0xf]
  %v1569 = vld [vmem:[%s1563 + $0x14] sm:$0xf]
  %v1570 = vld [vmem:[%s1563 + $0x18] sm:$0xf]
  %v1571 = vld [vmem:[%s1563 + $0x1c] sm:$0xf]
  %v1572 = vld [vmem:[%s1563 + $0x20] sm:$0xf]
  %v1573 = vld [vmem:[%s1563 + $0x24] sm:$0xf]
  %v1574 = vrot.slane %v1340, 3
  %v1575 = vrot.slane %v1341, 2
  %v1576 = vsel %vm1349, %v1575, %v1574
  %v1577 = vrot.slane %v1342, 1
  %v1578 = vsel %vm1352, %v1577, %v1576
  %v1579 = vsel %vm1355, %v1343, %v1578
  %v1580 = vrot.slane %v1344, 7
  %v1581 = vsel %vm1358, %v1580, %v1579
  %v1582 = vrot.slane %v1345, 6
  %v1583 = vsel %vm1361, %v1582, %v1581
  %v1584 = vrot.slane %v1346, 5
  %v1585 = vsel %vm1364, %v1584, %v1583
  %v1586 = vrot.slane %v1347, 4
  %v1587 = vsel %vm1367, %v1586, %v1585
  %v1588 = vpack.c.b16 %v1587, %v1587
  %v1599 = vunpack.c.l.b16 %v1564
  %v1600 = vunpack.c.l.b16 %v1565
  %v1601 = vunpack.c.l.b16 %v1566
  %v1602 = vunpack.c.l.b16 %v1567
  %v1603 = vunpack.c.l.b16 %v1568
  %v1604 = vunpack.c.l.b16 %v1569
  %v1605 = vunpack.c.l.b16 %v1570
  %v1606 = vunpack.c.l.b16 %v1571
  %v1607 = vunpack.c.l.b16 %v1572
  %v1608 = vunpack.c.l.b16 %v1573
  %v1609 = vpack.c.b16 %v1600, %v1599
  %v1610 = vpack.c.b16 %v1602, %v1601
  %v1611 = vpack.c.b16 %v1604, %v1603
  %v1612 = vpack.c.b16 %v1606, %v1605
  %v1613 = vpack.c.b16 %v1608, %v1607
  %v1620 = vsel %vm1400, %v1588, 0
  %1622 = vmatpush.bf16.msra.mxu0 0
  %1623 = vmatpush.bf16.msra.mxu0 0
  %1624 = vmatpush.bf16.msra.mxu0 0
  %1625 = vmatpush.bf16.msra.mxu0 %v1613
  %1626 = vmatpush.bf16.msra.mxu0 %v1612
  %1627 = vmatpush.bf16.msra.mxu0 %v1611
  %1628 = vmatpush.bf16.msra.mxu0 %v1610
  %1629 = vmatpush.bf16.msra.mxu0 %v1609
  %1630 = vmatmul.bf16.gmra.mxu0 %v1620
  %v1631 = vpop.f32.mrf.mxu0
  %v1632 = vadd.f32 0.0, %v1631
  %v1633 = vpop.f32.mrf.mxu0
  %1634 = vdwg.mxu0
  %v1635 = vadd.f32 %v1562, %v1632
  %s1636 = scalar_lea.vmem %s9, 160
  %v1637 = vld [vmem:[%s1636] sm:$0xf]
  %v1638 = vld [vmem:[%s1636 + $0x4] sm:$0xf]
  %v1639 = vld [vmem:[%s1636 + $0x8] sm:$0xf]
  %v1640 = vld [vmem:[%s1636 + $0xc] sm:$0xf]
  %v1641 = vld [vmem:[%s1636 + $0x10] sm:$0xf]
  %v1642 = vld [vmem:[%s1636 + $0x14] sm:$0xf]
  %v1643 = vld [vmem:[%s1636 + $0x18] sm:$0xf]
  %v1644 = vld [vmem:[%s1636 + $0x1c] sm:$0xf]
  %v1645 = vld [vmem:[%s1636 + $0x20] sm:$0xf]
  %v1646 = vld [vmem:[%s1636 + $0x24] sm:$0xf]
  %v1647 = vrot.slane %v1340, 4
  %v1648 = vrot.slane %v1341, 3
  %v1649 = vsel %vm1349, %v1648, %v1647
  %v1650 = vrot.slane %v1342, 2
  %v1651 = vsel %vm1352, %v1650, %v1649
  %v1652 = vrot.slane %v1343, 1
  %v1653 = vsel %vm1355, %v1652, %v1651
  %v1654 = vsel %vm1358, %v1344, %v1653
  %v1655 = vrot.slane %v1345, 7
  %v1656 = vsel %vm1361, %v1655, %v1654
  %v1657 = vrot.slane %v1346, 6
  %v1658 = vsel %vm1364, %v1657, %v1656
  %v1659 = vrot.slane %v1347, 5
  %v1660 = vsel %vm1367, %v1659, %v1658
  %v1661 = vpack.c.b16 %v1660, %v1660
  %v1672 = vunpack.c.l.b16 %v1637
  %v1673 = vunpack.c.l.b16 %v1638
  %v1674 = vunpack.c.l.b16 %v1639
  %v1675 = vunpack.c.l.b16 %v1640
  %v1676 = vunpack.c.l.b16 %v1641
  %v1677 = vunpack.c.l.b16 %v1642
  %v1678 = vunpack.c.l.b16 %v1643
  %v1679 = vunpack.c.l.b16 %v1644
  %v1680 = vunpack.c.l.b16 %v1645
  %v1681 = vunpack.c.l.b16 %v1646
  %v1682 = vpack.c.b16 %v1673, %v1672
  %v1683 = vpack.c.b16 %v1675, %v1674
  %v1684 = vpack.c.b16 %v1677, %v1676
  %v1685 = vpack.c.b16 %v1679, %v1678
  %v1686 = vpack.c.b16 %v1681, %v1680
  %v1693 = vsel %vm1400, %v1661, 0
  %1695 = vmatpush.bf16.msra.mxu0 0
  %1696 = vmatpush.bf16.msra.mxu0 0
  %1697 = vmatpush.bf16.msra.mxu0 0
  %1698 = vmatpush.bf16.msra.mxu0 %v1686
  %1699 = vmatpush.bf16.msra.mxu0 %v1685
  %1700 = vmatpush.bf16.msra.mxu0 %v1684
  %1701 = vmatpush.bf16.msra.mxu0 %v1683
  %1702 = vmatpush.bf16.msra.mxu0 %v1682
  %1703 = vmatmul.bf16.gmra.mxu0 %v1693
  %v1704 = vpop.f32.mrf.mxu0
  %v1705 = vadd.f32 0.0, %v1704
  %v1706 = vpop.f32.mrf.mxu0
  %1707 = vdwg.mxu0
  %v1708 = vadd.f32 %v1635, %v1705
  %v1709 = vmax.f32 %v1708, 0.0
  %v1710 = vpack.c.bf16 %v1709, %v1709
  %v1711 = vld [vmem:[%s11] sm:$0xf]
  %v1712 = vld [vmem:[%s11 + $0x4] sm:$0xf]
  %v1713 = vld [vmem:[%s11 + $0x8] sm:$0xf]
  %v1714 = vld [vmem:[%s11 + $0xc] sm:$0xf]
  %v1715 = vld [vmem:[%s11 + $0x10] sm:$0xf]
  %v1716 = vld [vmem:[%s11 + $0x14] sm:$0xf]
  %v1717 = vld [vmem:[%s11 + $0x18] sm:$0xf]
  %v1718 = vld [vmem:[%s11 + $0x1c] sm:$0xf]
  %v1719 = vld [vmem:[%s11 + $0x20] sm:$0xf]
  %v1720 = vld [vmem:[%s11 + $0x24] sm:$0xf]
  %v1721 = vld [vmem:[%s11 + $0x28] sm:$0xf]
  %v1722 = vld [vmem:[%s11 + $0x2c] sm:$0xf]
  %v1723 = vld [vmem:[%s11 + $0x30] sm:$0xf]
  %v1724 = vld [vmem:[%s11 + $0x34] sm:$0xf]
  %v1725 = vld [vmem:[%s11 + $0x38] sm:$0xf]
  %v1726 = vld [vmem:[%s12] sm:$0x1]
  %v1728 = vperm.slane %v1726, 0
  %v1745 = vunpack.c.l.b16 %v1711
  %v1746 = vunpack.c.l.b16 %v1712
  %v1747 = vunpack.c.l.b16 %v1713
  %v1748 = vunpack.c.l.b16 %v1714
  %v1749 = vunpack.c.l.b16 %v1715
  %v1750 = vunpack.c.l.b16 %v1716
  %v1751 = vunpack.c.l.b16 %v1717
  %v1752 = vunpack.c.l.b16 %v1718
  %v1753 = vunpack.c.l.b16 %v1719
  %v1754 = vunpack.c.l.b16 %v1720
  %v1755 = vunpack.c.l.b16 %v1721
  %v1756 = vunpack.c.l.b16 %v1722
  %v1757 = vunpack.c.l.b16 %v1723
  %v1758 = vunpack.c.l.b16 %v1724
  %v1759 = vunpack.c.l.b16 %v1725
  %v1760 = vpack.c.b16 %v1746, %v1745
  %v1761 = vpack.c.b16 %v1748, %v1747
  %v1762 = vpack.c.b16 %v1750, %v1749
  %v1763 = vpack.c.b16 %v1752, %v1751
  %v1764 = vpack.c.b16 %v1754, %v1753
  %v1765 = vpack.c.b16 %v1756, %v1755
  %v1766 = vpack.c.b16 %v1758, %v1757
  %v1767 = vpack.c.b16 %v1759, %v1759
  %vm1775 = vcmask 982016
  %v1777 = vsel %vm1775, %v1710, 0
  %vm1779 = vcmask 1043456
  %v1781 = vsel %vm1779, %v1767, 0
  %1783 = vmatpush.bf16.msra.mxu0 %v1781
  %1784 = vmatpush.bf16.msra.mxu0 %v1766
  %1785 = vmatpush.bf16.msra.mxu0 %v1765
  %1786 = vmatpush.bf16.msra.mxu0 %v1764
  %1787 = vmatpush.bf16.msra.mxu0 %v1763
  %1788 = vmatpush.bf16.msra.mxu0 %v1762
  %1789 = vmatpush.bf16.msra.mxu0 %v1761
  %1790 = vmatpush.bf16.msra.mxu0 %v1760
  %1791 = vmatmul.bf16.gmra.mxu0 %v1777
  %v1792 = vpop.f32.mrf.mxu0
  %v1793 = vadd.f32 %v1728, %v1792
  %v1794 = vpop.f32.mrf.mxu0
  %1795 = vdwg.mxu0
  %v1796 = vmax.f32 %v1793, 0.0
  %v1797 = vpack.c.bf16 %v1796, %v1796
  %v1798 = vld [vmem:[%s13] sm:$0xf]
  %v1799 = vld [vmem:[%s13 + $0x4] sm:$0xf]
  %v1800 = vld [vmem:[%s13 + $0x8] sm:$0xf]
  %v1801 = vld [vmem:[%s13 + $0xc] sm:$0xf]
  %v1802 = vld [vmem:[%s13 + $0x10] sm:$0xf]
  %v1803 = vld [vmem:[%s13 + $0x14] sm:$0xf]
  %v1804 = vld [vmem:[%s13 + $0x18] sm:$0xf]
  %v1805 = vld [vmem:[%s13 + $0x1c] sm:$0xf]
  %v1806 = vld [vmem:[%s13 + $0x20] sm:$0xf]
  %v1807 = vld [vmem:[%s13 + $0x24] sm:$0xf]
  %v1808 = vld [vmem:[%s13 + $0x28] sm:$0x3]
  %v1809 = vld [vmem:[%s14] sm:$0x1]
  %v1811 = vperm.slane %v1809, 0
  %v1824 = vunpack.c.l.b16 %v1798
  %v1825 = vunpack.c.l.b16 %v1799
  %v1826 = vunpack.c.l.b16 %v1800
  %v1827 = vunpack.c.l.b16 %v1801
  %v1828 = vunpack.c.l.b16 %v1802
  %v1829 = vunpack.c.l.b16 %v1803
  %v1830 = vunpack.c.l.b16 %v1804
  %v1831 = vunpack.c.l.b16 %v1805
  %v1832 = vunpack.c.l.b16 %v1806
  %v1833 = vunpack.c.l.b16 %v1807
  %v1834 = vunpack.c.l.b16 %v1808
  %v1835 = vpack.c.b16 %v1825, %v1824
  %v1836 = vpack.c.b16 %v1827, %v1826
  %v1837 = vpack.c.b16 %v1829, %v1828
  %v1838 = vpack.c.b16 %v1831, %v1830
  %v1839 = vpack.c.b16 %v1833, %v1832
  %v1840 = vpack.c.b16 %v1834, %v1834
  %vm1846 = vcmask 687104
  %v1848 = vsel %vm1846, %v1797, 0
  %vm1850 = vcmask 1041408
  %v1852 = vsel %vm1850, %v1840, 0
  %1854 = vmatpush.bf16.msra.mxu0 0
  %1855 = vmatpush.bf16.msra.mxu0 0
  %1856 = vmatpush.bf16.msra.mxu0 %v1852
  %1857 = vmatpush.bf16.msra.mxu0 %v1839
  %1858 = vmatpush.bf16.msra.mxu0 %v1838
  %1859 = vmatpush.bf16.msra.mxu0 %v1837
  %1860 = vmatpush.bf16.msra.mxu0 %v1836
  %1861 = vmatpush.bf16.msra.mxu0 %v1835
  %1862 = vmatmul.bf16.gmra.mxu0 %v1848
  %v1863 = vpop.f32.mrf.mxu0
  %v1864 = vadd.f32 %v1811, %v1863
  %v1865 = vpop.f32.mrf.mxu0
  %1866 = vdwg.mxu0
  %1867 = vst [vmem:[%s15] sm:$0xff] %v1864
  // Predicated region
  $region69: #{my_model_forward.1} parent=0 // pred_check
    _
  $region70: #{my_model_forward.1} parent=0 // pred_check_branch
    %1869 = sbr.rel (0) target = $region72
  $region71: #{my_model_forward.1} parent=0 // pred_region
    _
  $region72: #{my_model_forward.1} parent=0 // pred_fallthru
    _
  // Predicated region
  $region73: #{my_model_forward.1} parent=0 // pred_check
    _
  $region74: #{my_model_forward.1} parent=0 // pred_check_branch
    %1871 = sbr.rel (0) target = $region76
  $region75: #{my_model_forward.1} parent=0 // pred_region
    _
  $region76: #{my_model_forward.1} parent=0 // pred_fallthru
    _

</llo_original>
